<compile_context>
chip_gen: v6e
topology: v6e:2x2x1
jax: 0.10.0
libtpu: 0.0.40
codegen_flags: <defaults>
</compile_context>

<pallas_src>
import jax
import jax.numpy as jnp
from jax import lax
from jax.experimental import pallas as pl
from jax.experimental.pallas import tpu as pltpu


NUM_LANES = 128
# Finite "minus infinity": exp(MASK_VALUE - m) underflows to exactly 0 in f32.
MASK_VALUE = -0.7 * float(jnp.finfo(jnp.float32).max)


def _lane_tile(x, n):
    """Tile a (rows, NUM_LANES) lane-replicated value out to (rows, n)."""
    reps = n // NUM_LANES
    return x if reps == 1 else jnp.concatenate([x] * reps, axis=1)


# ---------------------------------------------------------------------------
# Kernel 1: fused QKV projection (scale pre-folded into Wq, lane-dense store).
# ---------------------------------------------------------------------------
def _qkv_proj_kernel(x_ref, w_ref, qkv_ref):
    # x_ref: (1, tr, C); w_ref: (C, 3*Hp); qkv_ref: (1, tr, 3*Hp) [q | k | v]
    proj = jnp.dot(x_ref[0], w_ref[...],
                   preferred_element_type=jnp.float32)   # (tr, 3*Hp), f32 acc
    qkv_ref[0] = proj.astype(qkv_ref.dtype)              # single lane-dense store


# ---------------------------------------------------------------------------
# Kernel 2: flash-attention style causal attention (online softmax).
# ---------------------------------------------------------------------------
def _flash_attn_kernel(q_ref, k_ref, v_ref, o_ref, m_sc, l_sc, acc_sc):
    # q_ref: (1, tq, Hp); k_ref/v_ref: (1, tk, Hp); o_ref: (1, tq, H)
    # m_sc/l_sc: (tq, NUM_LANES) f32 lane-replicated; acc_sc: (tq, Hp) f32
    qi = pl.program_id(1)
    ki = pl.program_id(2)
    tq = q_ref.shape[1]
    tk = k_ref.shape[1]
    hp = acc_sc.shape[-1]
    h = o_ref.shape[-1]

    @pl.when(ki == 0)
    def _init():
        m_sc[...] = jnp.full(m_sc.shape, -jnp.inf, dtype=m_sc.dtype)
        l_sc[...] = jnp.zeros(l_sc.shape, dtype=l_sc.dtype)
        acc_sc[...] = jnp.zeros(acc_sc.shape, dtype=acc_sc.dtype)

    def _online_softmax_update(s):
        # s: (tq, tk) f32 scores, already masked where required.
        m_prev = m_sc[...]                                   # (tq, 128)
        l_prev = l_sc[...]                                   # (tq, 128)
        m_cur = jnp.max(s, axis=-1, keepdims=True)           # (tq, 1)
        m_next = jnp.maximum(m_prev, m_cur)                  # (tq, 128), lanes equal
        alpha = jnp.exp(m_prev - m_next)                     # exactly 0 on first tile
        p = jnp.exp(s - _lane_tile(m_next, tk))              # (tq, tk)
        l_sc[...] = alpha * l_prev + jnp.sum(p, axis=-1, keepdims=True)
        acc_sc[...] = acc_sc[...] * _lane_tile(alpha, hp) + jnp.dot(
            p.astype(v_ref.dtype), v_ref[0], preferred_element_type=jnp.float32)
        m_sc[...] = m_next

    # Skip KV tiles entirely above the causal diagonal (their DMA is also
    # skipped via the clamped index_map in the wrapper).
    @pl.when(ki * tk < qi * tq + tq)
    def _compute():
        q = q_ref[0]                                         # (tq, Hp), scale folded
        k = k_ref[0]                                         # (tk, Hp)
        # Contract Hp of both operands directly -> no XLU transpose of k.
        s = lax.dot_general(q, k, (((1,), (1,)), ((), ())),
                            preferred_element_type=jnp.float32)   # (tq, tk)

        needs_mask = ki * tk + (tk - 1) > qi * tq            # tile straddles diagonal

        @pl.when(needs_mask)
        def _masked():
            row = qi * tq + lax.broadcasted_iota(jnp.int32, (tq, tk), 0)
            col = ki * tk + lax.broadcasted_iota(jnp.int32, (tq, tk), 1)
            _online_softmax_update(jnp.where(col <= row, s, MASK_VALUE))

        @pl.when(jnp.logical_not(needs_mask))
        def _unmasked():
            _online_softmax_update(s)

    @pl.when(ki == pl.num_programs(2) - 1)
    def _finalize():
        inv_l = pl.reciprocal(l_sc[...], approx=True)        # EUP vrcp (free slot)
        out = acc_sc[...] * _lane_tile(inv_l, hp)            # (tq, Hp)
        o_ref[0] = out[:, :h].astype(o_ref.dtype)            # drop zero pad lanes


# ---------------------------------------------------------------------------
# Wrapper
# ---------------------------------------------------------------------------
def head_attention(x, wk_t, wq_t, wv_t, *, tq=None, tk=None):
    """x: (B, T, C); w*_t: (C, H) transposed nn.Linear weights. Returns (B, T, H)."""
    B, T, C = x.shape
    H = wk_t.shape[-1]
    Hp = ((H + NUM_LANES - 1) // NUM_LANES) * NUM_LANES      # lane-padded head size

    # Default tiles: 256 (v6e/v7x MXU is 2x256x256 and it minimizes grid steps).
    def _default_tile(t):
        for cand in (256, 128):
            if t % cand == 0:
                return cand
        return t
    tq = _default_tile(T) if tq is None else tq
    tk = _default_tile(T) if tk is None else tk
    assert T % tq == 0 and T % tk == 0, (T, tq, tk)
    assert tk % NUM_LANES == 0 and tq % 8 == 0, (tq, tk)

    dtype = x.dtype
    itemsize = jnp.dtype(dtype).itemsize
    scale = float(H) ** -0.5

    def _pad_head(w):  # (C, H) -> (C, Hp); zero lanes are numerically inert
        return w if Hp == H else jnp.pad(w, ((0, 0), (0, Hp - H)))

    # Fold the attention scale into Wq and fuse the three projections: (C, 3*Hp).
    w_qkv = jnp.concatenate(
        [_pad_head(wq_t * scale), _pad_head(wk_t), _pad_head(wv_t)],
        axis=-1).astype(dtype)

    # ---- QKV projection -----------------------------------------------------
    proj_cost = pl.CostEstimate(
        flops=2 * B * T * C * 3 * Hp,
        transcendentals=0,
        bytes_accessed=(B * T * C + C * 3 * Hp + B * T * 3 * Hp) * itemsize,
    )
    qkv = pl.pallas_call(
        _qkv_proj_kernel,
        out_shape=jax.ShapeDtypeStruct((B, T, 3 * Hp), dtype),
        grid_spec=pltpu.PrefetchScalarGridSpec(
            num_scalar_prefetch=0,
            grid=(B, T // tq),
            in_specs=[
                pl.BlockSpec((1, tq, C), lambda b, i: (b, i, 0)),
                pl.BlockSpec((C, 3 * Hp), lambda b, i: (0, 0)),
            ],
            out_specs=pl.BlockSpec((1, tq, 3 * Hp), lambda b, i: (b, i, 0)),
        ),
        compiler_params=pltpu.CompilerParams(
            dimension_semantics=("parallel", "parallel"),
            vmem_limit_bytes=32 * 1024 * 1024,
        ),
        cost_estimate=proj_cost,
    )(x, w_qkv)

    # ---- flash attention ----------------------------------------------------
    nq, nk = T // tq, T // tk

    def _last_kv_block(qi):
        # Highest KV tile index the q tile `qi` actually attends to.
        return (qi * tq + tq - 1) // tk

    # Clamp the KV block index for above-diagonal steps so Pallas re-uses the
    # previous block (no DMA issued); the compute for those steps is skipped
    # inside the kernel by pl.when.
    k_spec = pl.BlockSpec(
        (1, tk, Hp), lambda b, qi, ki: (b, jnp.minimum(ki, _last_kv_block(qi)), 1))
    v_spec = pl.BlockSpec(
        (1, tk, Hp), lambda b, qi, ki: (b, jnp.minimum(ki, _last_kv_block(qi)), 2))

    n_live_tiles = sum(min(nk, (qi * tq + tq - 1) // tk + 1) for qi in range(nq))
    attn_cost = pl.CostEstimate(
        flops=2 * 2 * B * n_live_tiles * tq * tk * Hp,
        transcendentals=B * n_live_tiles * tq * tk,
        bytes_accessed=(B * nq * tq * Hp                 # q: fetched once per (b, qi)
                        + 2 * B * n_live_tiles * tk * Hp  # k, v: live causal tiles only
                        + B * T * H) * itemsize,
    )
    out = pl.pallas_call(
        _flash_attn_kernel,
        out_shape=jax.ShapeDtypeStruct((B, T, H), dtype),
        grid_spec=pltpu.PrefetchScalarGridSpec(
            num_scalar_prefetch=0,
            grid=(B, nq, nk),
            in_specs=[
                pl.BlockSpec((1, tq, Hp), lambda b, qi, ki: (b, qi, 0)),  # q
                k_spec,                                                    # k
                v_spec,                                                    # v
            ],
            out_specs=pl.BlockSpec((1, tq, H), lambda b, qi, ki: (b, qi, 0)),
            scratch_shapes=[
                pltpu.VMEM((tq, NUM_LANES), jnp.float32),   # running max m
                pltpu.VMEM((tq, NUM_LANES), jnp.float32),   # running denom l
                pltpu.VMEM((tq, Hp), jnp.float32),          # output accumulator
            ],
        ),
        compiler_params=pltpu.CompilerParams(
            dimension_semantics=("parallel", "parallel", "arbitrary"),
            vmem_limit_bytes=32 * 1024 * 1024,
        ),
        cost_estimate=attn_cost,
    )(qkv, qkv, qkv)
    return out


def head_attention_ref(x, wk_t, wq_t, wv_t):
    """Plain-JAX reference mirroring the PyTorch forward (eval mode)."""
    k = x @ wk_t
    q = x @ wq_t
    v = x @ wv_t
    scale = k.shape[-1] ** (-0.5)
    wei = (q @ jnp.swapaxes(k, -2, -1)) * scale
    T = x.shape[1]
    tril = jnp.tril(jnp.ones((T, T), dtype=bool))
    wei = jnp.where(tril, wei, -jnp.inf)
    wei = jax.nn.softmax(wei, axis=-1)
    return wei @ v


if __name__ == "__main__":
    # Module-consistent shapes: block_size=256, n_embed=384, head_size=64.
    B, T, C, H = 2, 256, 384, 64

    key = jax.random.PRNGKey(0)
    kx, kk, kq, kv = jax.random.split(key, 4)

    x = jax.random.normal(kx, (B, T, C), dtype=jnp.float32)
    # nn.Linear(n_embed, head_size, bias=False) weight is (H, C); store transposed (C, H)
    wk_t = (jax.random.normal(kk, (H, C), dtype=jnp.float32) * (C ** -0.5)).T
    wq_t = (jax.random.normal(kq, (H, C), dtype=jnp.float32) * (C ** -0.5)).T
    wv_t = (jax.random.normal(kv, (H, C), dtype=jnp.float32) * (C ** -0.5)).T

    # f32 path: tight parity check against the reference.
    out = jax.block_until_ready(head_attention(x, wk_t, wq_t, wv_t))
    ref = head_attention_ref(x, wk_t, wq_t, wv_t)
    assert out.shape == (B, T, H), out.shape
    max_err = float(jnp.max(jnp.abs(out - ref)))
    # approx=True reciprocal in the softmax finalize -> ~1e-3-level differences.
    assert jnp.allclose(out, ref, atol=5e-3, rtol=5e-3), max_err

    # bf16 perf-configuration (MXU-native inputs, f32 accumulation): loose check.
    out_bf16 = jax.block_until_ready(
        head_attention(x.astype(jnp.bfloat16),
                       wk_t.astype(jnp.bfloat16),
                       wq_t.astype(jnp.bfloat16),
                       wv_t.astype(jnp.bfloat16)))
    assert out_bf16.shape == (B, T, H), out_bf16.shape
    out_bf16_f32 = out_bf16.astype(jnp.float32)
    assert bool(jnp.all(jnp.isfinite(out_bf16_f32)))
    assert jnp.allclose(out_bf16_f32, ref, atol=1.5e-1, rtol=1.5e-1), \
        float(jnp.max(jnp.abs(out_bf16_f32 - ref)))

    print("KERNEL_OK")
</pallas_src>

<mosaic_0001>
module attributes {stable_mosaic.version = 11 : i64} {
  func.func @_qkv_proj_kernel(%arg0: i32, %arg1: i32, %arg2: memref<1x256x384xf32, #tpu.memory_space<vmem>>, %arg3: memref<384x384xf32, #tpu.memory_space<vmem>>, %arg4: memref<1x256x384xf32, #tpu.memory_space<vmem>>) attributes {dimension_semantics = [#tpu.dimension_semantics<parallel>, #tpu.dimension_semantics<parallel>], iteration_bounds = array<i64: 2, 1>, scalar_prefetch = 0 : i64, scratch_operands = 0 : i64, tpu.core_type = #tpu.core_type<tc>, window_params = [{transform_indices = @transform_0, window_bounds = array<i64: 1, 256, 384>}, {pipeline_mode = #tpu.pipeline_mode<synchronous>, transform_indices = @transform_1, window_bounds = array<i64: 384, 384>}, {transform_indices = @transform_2, window_bounds = array<i64: 1, 256, 384>}]} {
    %c0 = arith.constant 0 : index
    %c0_0 = arith.constant 0 : index
    %c0_1 = arith.constant 0 : index
    %0 = vector.load %arg2[%c0, %c0_0, %c0_1] : memref<1x256x384xf32, #tpu.memory_space<vmem>>, vector<1x256x384xf32>
    %1 = vector.shape_cast %0 : vector<1x256x384xf32> to vector<256x384xf32>
    %c0_2 = arith.constant 0 : index
    %c0_3 = arith.constant 0 : index
    %2 = vector.load %arg3[%c0_2, %c0_3] : memref<384x384xf32, #tpu.memory_space<vmem>>, vector<384x384xf32>
    %cst = arith.constant dense<0.000000e+00> : vector<256x384xf32>
    %3 = tpu.matmul %1, %2, %cst {dimension_numbers = #tpu.dot_dimension_numbers<[1], [0], [0], [1], [0, 0, 1, 1], [], []>} : vector<256x384xf32>, vector<384x384xf32>, vector<256x384xf32> -> vector<256x384xf32>
    %c0_4 = arith.constant 0 : index
    %c0_5 = arith.constant 0 : index
    %c0_6 = arith.constant 0 : index
    %4 = vector.load %arg4[%c0_4, %c0_5, %c0_6] : memref<1x256x384xf32, #tpu.memory_space<vmem>>, vector<1x256x384xf32>
    %5 = vector.shape_cast %4 : vector<1x256x384xf32> to vector<256x384xf32>
    %6 = vector.shape_cast %3 : vector<256x384xf32> to vector<1x256x384xf32>
    tpu.vector_store %arg4[%c0_4, %c0_5, %c0_6], %6 {strides = array<i32>} : memref<1x256x384xf32, #tpu.memory_space<vmem>>, vector<1x256x384xf32>,
    return
  }
  func.func @transform_0(%arg0: i32, %arg1: i32) -> (i32, i32, i32) {
    %c0_i32 = arith.constant 0 : i32
    %c0_i32_0 = arith.constant 0 : i32
    return %arg0, %arg1, %c0_i32 : i32, i32, i32
  }
  func.func @transform_1(%arg0: i32, %arg1: i32) -> (i32, i32) {
    %c0_i32 = arith.constant 0 : i32
    %c0_i32_0 = arith.constant 0 : i32
    %c0_i32_1 = arith.constant 0 : i32
    return %c0_i32, %c0_i32_0 : i32, i32
  }
  func.func @transform_2(%arg0: i32, %arg1: i32) -> (i32, i32, i32) {
    %c0_i32 = arith.constant 0 : i32
    %c0_i32_0 = arith.constant 0 : i32
    return %arg0, %arg1, %c0_i32 : i32, i32, i32
  }
}

</mosaic_0001>

<llo_original>
// kernel: tpu_custom_call.1
$region0: #{tpu_custom_call.1}
  #allocation0 [shape = 'u32[]', space=smem, size = 0x4, offset = 0x4, fixed_abs, tag = 'smem constant byte address 0x4 - core index']
  #allocation1 [shape = 'u32[144,128]{1,0:T(1,128)}', space=vmem, size = 0x12000, scoped, tag = 'internal scratch']
  %s0 = inlined_call_operand.hbm [shape: f32[2,256,384], index: 0, kind: input, shape index: {}]
  %s1 = inlined_call_operand.hbm [shape: f32[384,384], index: 1, kind: input, shape index: {}]
  %s2 = inlined_call_operand.hbm [shape: f32[2,256,384], index: 2, kind: output, shape index: {}]
  %s3 = sld [smem:[#allocation0]]
  $region49: #{tpu_custom_call.1} parent=0
    _
  %s5 = ssub.s32 1, %s3
  %s6 = scalar_select 0, %s5, %s3
  $region1: #{tpu_custom_call.1} parent=0
    #allocation2 [shape = 'u8[786432]{0}', space=vmem, size = 0xc0000, scoped, tag = 'input window, operand 0']
    #allocation3 [shape = 's32[2]{0}', space=sflag, size = 0x8, scoped, tag = 'scoped memory for tpu_custom_call.1']
    #allocation4 [shape = 's32[2]{0}', space=sflag, size = 0x8, scoped, tag = 'scoped memory for tpu_custom_call.1']
    #allocation5 [shape = 'u8[589824]{0}', space=vmem, size = 0x90000, scoped, tag = 'input window, operand 1, single buffered']
    #allocation6 [shape = 's32[1]{0}', space=sflag, size = 0x4, scoped, tag = 'scoped memory for tpu_custom_call.1']
    #allocation7 [shape = 'u8[786432]{0}', space=vmem, size = 0xc0000, scoped, tag = 'output window, operand 0']
    %7 = vsyncpa [#allocation3], 0
    %s8 = scalar_lea.sflag [#allocation3], 1
    %9 = vsyncpa %s8, 0
    %10 = vsyncpa [#allocation6], 0
    %11 = vsyncpa [#allocation4], 0
    %s12 = scalar_lea.sflag [#allocation4], 1
    %13 = vsyncpa %s12, 0
    loop: start=0, step=1, limit=4
    $region2: #{tpu_custom_call.1} parent=1 // loop_pre_header
      _
    $region3: #{tpu_custom_call.1} parent=1 // loop_header
      %s15 = sphi 0, %s19
      %p16 = scmp.ge.s32.totalorder %s15, 4
      %s22 = sphi 0, %s34
      %s23 = sphi 0, %s30
      %s24 = sphi 0, %s22
      %s25 = sphi 0, %s23
      %s26 = sphi 0, %s24
      %s27 = sphi 0, %s25
      %s39 = sphi 0, %s41
      %s42 = sphi 0, %s39
      %s43 = sphi 0, %s42
      %s59 = sphi 0, %s43
      %s63 = sphi 0, %s63
      %s65 = sphi 0, %s63
      %s66 = sphi 0, %s65
      %s80 = sphi 0, %s66
      %s88 = sphi 0, %s90
      %s91 = sphi 0, %s88
      %s92 = sphi 0, %s91
      %s108 = sphi 0, %s92
    $region4: #{tpu_custom_call.1} parent=1 // loop_header_branch
      %18 = sbr.rel (%p16) target = $region8
    $region5: #{tpu_custom_call.1} parent=1 // loop_body
      %s20 = ssub.s32 %s15, 1
      %s21 = ssub.s32 %s15, 2
      %s28 = sadd.s32 1, %s23
      %p29 = scmp.ge.s32.totalorder %s28, 1
      %s30 = scalar_select %p29, 0, %s28
      %s31 = sadd.s32 1, %s22
      %s32 = scalar_select %p29, %s31, %s22
      %p33 = scmp.ge.s32.totalorder %s32, 2
      %s34 = scalar_select %p33, 0, %s32
      %s35 = ssub.s32 %s22, %s34
      %s36 = ssub.s32 %s23, %s30
      %s37 = sor.u32 %s35, %s36
      %p38 = scmp.eq.s32.totalorder %s37, 0
      %s40 = sadd.s32 %s39, 1
      %s41 = scalar_select %p38, %s39, %s40
      %p44 = pneg %p38
      %p45 = scmp.eq.s32.totalorder %s15, 1
      %p46 = por %p44, %p45
      %p47 = scmp.ne.s32.totalorder %s39, %s42
      %p48 = scmp.eq.s32.totalorder %s15, 0
      %p49 = por %p47, %p48
      %p50 = scmp.ne.s32.totalorder %s39, %s42
      %p51 = scmp.eq.s32.totalorder %s20, 1
      %p52 = por %p50, %p51
      %p53 = scmp.ne.s32.totalorder %s42, %s43
      %p54 = scmp.eq.s32.totalorder %s20, 0
      %p55 = por %p53, %p54
      %p56 = scmp.ne.s32.totalorder %s42, %s43
      %p57 = scmp.eq.s32.totalorder %s21, 1
      %p58 = por %p56, %p57
      %p60 = scmp.ne.s32.totalorder %s43, %s59
      %p61 = scmp.eq.s32.totalorder %s21, 0
      %p62 = por %p60, %p61
      %s64 = sadd.s32 %s63, 1
      %p67 = scmp.eq.s32.totalorder %s15, 1
      %p68 = scmp.ne.s32.totalorder %s63, %s65
      %p69 = scmp.eq.s32.totalorder %s15, 0
      %p70 = por %p68, %p69
      %p71 = scmp.ne.s32.totalorder %s63, %s65
      %p72 = scmp.eq.s32.totalorder %s20, 1
      %p73 = por %p71, %p72
      %p74 = scmp.ne.s32.totalorder %s65, %s66
      %p75 = scmp.eq.s32.totalorder %s20, 0
      %p76 = por %p74, %p75
      %p77 = scmp.ne.s32.totalorder %s65, %s66
      %p78 = scmp.eq.s32.totalorder %s21, 1
      %p79 = por %p77, %p78
      %p81 = scmp.ne.s32.totalorder %s66, %s80
      %p82 = scmp.eq.s32.totalorder %s21, 0
      %p83 = por %p81, %p82
      %s84 = ssub.s32 %s22, %s34
      %s85 = ssub.s32 %s23, %s30
      %s86 = sor.u32 %s84, %s85
      %p87 = scmp.eq.s32.totalorder %s86, 0
      %s89 = sadd.s32 %s88, 1
      %s90 = scalar_select %p87, %s88, %s89
      %p93 = pneg %p87
      %p94 = scmp.eq.s32.totalorder %s15, 1
      %p95 = por %p93, %p94
      %p96 = scmp.ne.s32.totalorder %s88, %s91
      %p97 = scmp.eq.s32.totalorder %s15, 0
      %p98 = por %p96, %p97
      %p99 = scmp.ne.s32.totalorder %s88, %s91
      %p100 = scmp.eq.s32.totalorder %s20, 1
      %p101 = por %p99, %p100
      %p102 = scmp.ne.s32.totalorder %s91, %s92
      %p103 = scmp.eq.s32.totalorder %s20, 0
      %p104 = por %p102, %p103
      %p105 = scmp.ne.s32.totalorder %s91, %s92
      %p106 = scmp.eq.s32.totalorder %s21, 1
      %p107 = por %p105, %p106
      %p109 = scmp.ne.s32.totalorder %s92, %s108
      %p110 = scmp.eq.s32.totalorder %s21, 0
      %p111 = por %p109, %p110
      %p112 = scmp.le.s32.totalorder 1, %s15
      %p113 = scmp.lt.s32.totalorder %s15, 3
      %p114 = pnand %p112, %p113
      %p115 = pneg %p114
      // Predicated region
      $region9: #{tpu_custom_call.1} parent=5 // pred_check
        _
      $region10: #{tpu_custom_call.1} parent=5 // pred_check_branch
        %117 = sbr.rel (%p114) target = $region12
      $region11: #{tpu_custom_call.1} parent=5 // pred_region
        %s118 = ssub.s32 %s15, 1
        // Predicated region
        $region13: #{tpu_custom_call.1} parent=11 // pred_check
          %p119 = pneg %p76
        $region14: #{tpu_custom_call.1} parent=11 // pred_check_branch
          %121 = sbr.rel (%p119) target = $region16
        $region15: #{tpu_custom_call.1} parent=11 // pred_region
          %s123 = ssub.s32 18432, 18432
          %124 = vsyncadd [#allocation6], %s123
          %s125 = sshll.u32 [#allocation5], 4
          %s126 = int_to_ptr.vmem [resolvable:$true] %s125
          %131 = dma.hbm_to_vmem [thread:$0]  %s1, 18432, %s126, [#allocation6], 384, 384, 24
        $region16: #{tpu_custom_call.1} parent=11 // pred_fallthru
          _
      $region12: #{tpu_custom_call.1} parent=5 // pred_fallthru
        _
      %p132 = scmp.lt.s32.totalorder %s15, 2
      // Predicated region
      $region17: #{tpu_custom_call.1} parent=5 // pred_check
        %p133 = pneg %p132
      $region18: #{tpu_custom_call.1} parent=5 // pred_check_branch
        %135 = sbr.rel (%p133) target = $region20
      $region19: #{tpu_custom_call.1} parent=5 // pred_region
        // Predicated region
        $region21: #{tpu_custom_call.1} parent=19 // pred_check
          %p136 = pneg %p49
        $region22: #{tpu_custom_call.1} parent=19 // pred_check_branch
          %138 = sbr.rel (%p136) target = $region24
        $region23: #{tpu_custom_call.1} parent=19 // pred_region
          %s139 = sand.u32 %s39, 1
          %s140 = scalar_lea.sflag [#allocation3], %s139
          %s141 = sand.u32 %s39, 1
          %s142 = smul.addr %s141, 768
          %s143 = scalar_lea.vmem [#allocation2], %s142
          %s144 = smul.u32 32, %s23
          %s146 = ssub.s32 12288, 12288
          %147 = vsyncadd %s140, %s146
          %s148 = smul.addr %s144, 3
          %s149 = smul.addr %s22, 96
          %s150 = sadd.s32 %s148, %s149
          %s151 = smul.addr %s150, 128
          %s152 = scalar_lea.hbm %s0, %s151
          %s153 = sshll.u32 %s143, 4
          %s154 = int_to_ptr.vmem [resolvable:$true] %s153
          %159 = dma.hbm_to_vmem [thread:$0]  %s152, 12288, %s154, %s140, 384, 384, 24
        $region24: #{tpu_custom_call.1} parent=19 // pred_fallthru
          _
      $region20: #{tpu_custom_call.1} parent=5 // pred_fallthru
        _
      %p160 = scmp.le.s32.totalorder 1, %s15
      %p161 = scmp.lt.s32.totalorder %s15, 3
      %p162 = pnand %p160, %p161
      %p163 = pneg %p162
      // Predicated region
      $region25: #{tpu_custom_call.1} parent=5 // pred_check
        _
      $region26: #{tpu_custom_call.1} parent=5 // pred_check_branch
        %165 = sbr.rel (%p162) target = $region28
      $region27: #{tpu_custom_call.1} parent=5 // pred_region
        %s166 = ssub.s32 %s15, 1
        %s167 = sand.u32 %s42, 1
        %s168 = scalar_lea.sflag [#allocation3], %s167
        %s169 = sand.u32 %s42, 1
        %s170 = smul.addr %s169, 768
        %s171 = scalar_lea.vmem [#allocation2], %s170
        // Predicated region
        $region29: #{tpu_custom_call.1} parent=27 // pred_check
          %p172 = pneg %p55
        $region30: #{tpu_custom_call.1} parent=27 // pred_check_branch
          %174 = sbr.rel (%p172) target = $region32
        $region31: #{tpu_custom_call.1} parent=27 // pred_region
          %175 = dma.done %s168, 12288
        $region32: #{tpu_custom_call.1} parent=27 // pred_fallthru
          _
        // Predicated region
        $region33: #{tpu_custom_call.1} parent=27 // pred_check
          %p176 = pneg %p76
        $region34: #{tpu_custom_call.1} parent=27 // pred_check_branch
          %178 = sbr.rel (%p176) target = $region36
        $region35: #{tpu_custom_call.1} parent=27 // pred_region
          %179 = dma.done [#allocation6], 18432
        $region36: #{tpu_custom_call.1} parent=27 // pred_fallthru
          _
        %s180 = sand.u32 %s42, 1
        %s181 = scalar_lea.sflag [#allocation3], %s180
        %s182 = sand.u32 %s42, 1
        %s183 = smul.addr %s182, 768
        %s184 = scalar_lea.vmem [#allocation2], %s183
        %p185 = pneg %p55
        %p186 = pneg %p52
        %p187 = pneg %p76
        %p188 = pneg %p73
        %p189 = pneg %p104
        %p190 = pneg %p101
        %s191 = sand.u32 %s91, 1
        %s192 = scalar_lea.sflag [#allocation4], %s191
        %s193 = sand.u32 %s91, 1
        %s194 = smul.addr %s193, 768
        %s195 = scalar_lea.vmem [#allocation7], %s194
        %s196 = smul.u32 32, %s25
        %s197 = smul.u32 32, %s25
        %v198 = vld [vmem:[%s171] sm:$0xff]
        %v199 = vld [vmem:[%s171 + $0x8] sm:$0xff]
        %v200 = vld [vmem:[%s171 + $0x10] sm:$0xff]
        %v201 = vld [vmem:[%s171 + $0x18] sm:$0xff]
        %v202 = vld [vmem:[%s171 + $0x20] sm:$0xff]
        %v203 = vld [vmem:[%s171 + $0x28] sm:$0xff]
        %v204 = vld [vmem:[%s171 + $0x30] sm:$0xff]
        %v205 = vld [vmem:[%s171 + $0x38] sm:$0xff]
        %v206 = vld [vmem:[%s171 + $0x40] sm:$0xff]
        %v207 = vld [vmem:[%s171 + $0x48] sm:$0xff]
        %v208 = vld [vmem:[%s171 + $0x50] sm:$0xff]
        %v209 = vld [vmem:[%s171 + $0x58] sm:$0xff]
        %v210 = vld [vmem:[%s171 + $0x60] sm:$0xff]
        %v211 = vld [vmem:[%s171 + $0x68] sm:$0xff]
        %v212 = vld [vmem:[%s171 + $0x70] sm:$0xff]
        %v213 = vld [vmem:[%s171 + $0x78] sm:$0xff]
        %v214 = vld [vmem:[%s171 + $0x80] sm:$0xff]
        %v215 = vld [vmem:[%s171 + $0x88] sm:$0xff]
        %v216 = vld [vmem:[%s171 + $0x90] sm:$0xff]
        %v217 = vld [vmem:[%s171 + $0x98] sm:$0xff]
        %v218 = vld [vmem:[%s171 + $0xa0] sm:$0xff]
        %v219 = vld [vmem:[%s171 + $0xa8] sm:$0xff]
        %v220 = vld [vmem:[%s171 + $0xb0] sm:$0xff]
        %v221 = vld [vmem:[%s171 + $0xb8] sm:$0xff]
        %v222 = vld [vmem:[%s171 + $0xc0] sm:$0xff]
        %v223 = vld [vmem:[%s171 + $0xc8] sm:$0xff]
        %v224 = vld [vmem:[%s171 + $0xd0] sm:$0xff]
        %v225 = vld [vmem:[%s171 + $0xd8] sm:$0xff]
        %v226 = vld [vmem:[%s171 + $0xe0] sm:$0xff]
        %v227 = vld [vmem:[%s171 + $0xe8] sm:$0xff]
        %v228 = vld [vmem:[%s171 + $0xf0] sm:$0xff]
        %v229 = vld [vmem:[%s171 + $0xf8] sm:$0xff]
        %v230 = vld [vmem:[%s171 + $0x100] sm:$0xff]
        %v231 = vld [vmem:[%s171 + $0x108] sm:$0xff]
        %v232 = vld [vmem:[%s171 + $0x110] sm:$0xff]
        %v233 = vld [vmem:[%s171 + $0x118] sm:$0xff]
        %v234 = vld [vmem:[%s171 + $0x120] sm:$0xff]
        %v235 = vld [vmem:[%s171 + $0x128] sm:$0xff]
        %v236 = vld [vmem:[%s171 + $0x130] sm:$0xff]
        %v237 = vld [vmem:[%s171 + $0x138] sm:$0xff]
        %v238 = vld [vmem:[%s171 + $0x140] sm:$0xff]
        %v239 = vld [vmem:[%s171 + $0x148] sm:$0xff]
        %v240 = vld [vmem:[%s171 + $0x150] sm:$0xff]
        %v241 = vld [vmem:[%s171 + $0x158] sm:$0xff]
        %v242 = vld [vmem:[%s171 + $0x160] sm:$0xff]
        %v243 = vld [vmem:[%s171 + $0x168] sm:$0xff]
        %v244 = vld [vmem:[%s171 + $0x170] sm:$0xff]
        %v245 = vld [vmem:[%s171 + $0x178] sm:$0xff]
        %v246 = vld [vmem:[%s171 + $0x180] sm:$0xff]
        %v247 = vld [vmem:[%s171 + $0x188] sm:$0xff]
        %v248 = vld [vmem:[%s171 + $0x190] sm:$0xff]
        %v249 = vld [vmem:[%s171 + $0x198] sm:$0xff]
        %v250 = vld [vmem:[%s171 + $0x1a0] sm:$0xff]
        %v251 = vld [vmem:[%s171 + $0x1a8] sm:$0xff]
        %v252 = vld [vmem:[%s171 + $0x1b0] sm:$0xff]
        %v253 = vld [vmem:[%s171 + $0x1b8] sm:$0xff]
        %v254 = vld [vmem:[%s171 + $0x1c0] sm:$0xff]
        %v255 = vld [vmem:[%s171 + $0x1c8] sm:$0xff]
        %v256 = vld [vmem:[%s171 + $0x1d0] sm:$0xff]
        %v257 = vld [vmem:[%s171 + $0x1d8] sm:$0xff]
        %v258 = vld [vmem:[%s171 + $0x1e0] sm:$0xff]
        %v259 = vld [vmem:[%s171 + $0x1e8] sm:$0xff]
        %v260 = vld [vmem:[%s171 + $0x1f0] sm:$0xff]
        %v261 = vld [vmem:[%s171 + $0x1f8] sm:$0xff]
        %v262 = vld [vmem:[%s171 + $0x200] sm:$0xff]
        %v263 = vld [vmem:[%s171 + $0x208] sm:$0xff]
        %v264 = vld [vmem:[%s171 + $0x210] sm:$0xff]
        %v265 = vld [vmem:[%s171 + $0x218] sm:$0xff]
        %v266 = vld [vmem:[%s171 + $0x220] sm:$0xff]
        %v267 = vld [vmem:[%s171 + $0x228] sm:$0xff]
        %v268 = vld [vmem:[%s171 + $0x230] sm:$0xff]
        %v269 = vld [vmem:[%s171 + $0x238] sm:$0xff]
        %v270 = vld [vmem:[%s171 + $0x240] sm:$0xff]
        %v271 = vld [vmem:[%s171 + $0x248] sm:$0xff]
        %v272 = vld [vmem:[%s171 + $0x250] sm:$0xff]
        %v273 = vld [vmem:[%s171 + $0x258] sm:$0xff]
        %v274 = vld [vmem:[%s171 + $0x260] sm:$0xff]
        %v275 = vld [vmem:[%s171 + $0x268] sm:$0xff]
        %v276 = vld [vmem:[%s171 + $0x270] sm:$0xff]
        %v277 = vld [vmem:[%s171 + $0x278] sm:$0xff]
        %v278 = vld [vmem:[%s171 + $0x280] sm:$0xff]
        %v279 = vld [vmem:[%s171 + $0x288] sm:$0xff]
        %v280 = vld [vmem:[%s171 + $0x290] sm:$0xff]
        %v281 = vld [vmem:[%s171 + $0x298] sm:$0xff]
        %v282 = vld [vmem:[%s171 + $0x2a0] sm:$0xff]
        %v283 = vld [vmem:[%s171 + $0x2a8] sm:$0xff]
        %v284 = vld [vmem:[%s171 + $0x2b0] sm:$0xff]
        %v285 = vld [vmem:[%s171 + $0x2b8] sm:$0xff]
        %v286 = vld [vmem:[%s171 + $0x2c0] sm:$0xff]
        %v287 = vld [vmem:[%s171 + $0x2c8] sm:$0xff]
        %v288 = vld [vmem:[%s171 + $0x2d0] sm:$0xff]
        %v289 = vld [vmem:[%s171 + $0x2d8] sm:$0xff]
        %v290 = vld [vmem:[%s171 + $0x2e0] sm:$0xff]
        %v291 = vld [vmem:[%s171 + $0x2e8] sm:$0xff]
        %v292 = vld [vmem:[%s171 + $0x2f0] sm:$0xff]
        %v293 = vld [vmem:[%s171 + $0x2f8] sm:$0xff]
        %v294 = vld [vmem:[#allocation5] sm:$0xff]
        %v295 = vld [vmem:[#allocation5 + $0x8] sm:$0xff]
        %v296 = vld [vmem:[#allocation5 + $0x10] sm:$0xff]
        %v297 = vld [vmem:[#allocation5 + $0x18] sm:$0xff]
        %v298 = vld [vmem:[#allocation5 + $0x20] sm:$0xff]
        %v299 = vld [vmem:[#allocation5 + $0x28] sm:$0xff]
        %v300 = vld [vmem:[#allocation5 + $0x30] sm:$0xff]
        %v301 = vld [vmem:[#allocation5 + $0x38] sm:$0xff]
        %v302 = vld [vmem:[#allocation5 + $0x40] sm:$0xff]
        %v303 = vld [vmem:[#allocation5 + $0x48] sm:$0xff]
        %v304 = vld [vmem:[#allocation5 + $0x50] sm:$0xff]
        %v305 = vld [vmem:[#allocation5 + $0x58] sm:$0xff]
        %v306 = vld [vmem:[#allocation5 + $0x60] sm:$0xff]
        %v307 = vld [vmem:[#allocation5 + $0x68] sm:$0xff]
        %v308 = vld [vmem:[#allocation5 + $0x70] sm:$0xff]
        %v309 = vld [vmem:[#allocation5 + $0x78] sm:$0xff]
        %v310 = vld [vmem:[#allocation5 + $0x80] sm:$0xff]
        %v311 = vld [vmem:[#allocation5 + $0x88] sm:$0xff]
        %v312 = vld [vmem:[#allocation5 + $0x90] sm:$0xff]
        %v313 = vld [vmem:[#allocation5 + $0x98] sm:$0xff]
        %v314 = vld [vmem:[#allocation5 + $0xa0] sm:$0xff]
        %v315 = vld [vmem:[#allocation5 + $0xa8] sm:$0xff]
        %v316 = vld [vmem:[#allocation5 + $0xb0] sm:$0xff]
        %v317 = vld [vmem:[#allocation5 + $0xb8] sm:$0xff]
        %v318 = vld [vmem:[#allocation5 + $0xc0] sm:$0xff]
        %v319 = vld [vmem:[#allocation5 + $0xc8] sm:$0xff]
        %v320 = vld [vmem:[#allocation5 + $0xd0] sm:$0xff]
        %v321 = vld [vmem:[#allocation5 + $0xd8] sm:$0xff]
        %v322 = vld [vmem:[#allocation5 + $0xe0] sm:$0xff]
        %v323 = vld [vmem:[#allocation5 + $0xe8] sm:$0xff]
        %v324 = vld [vmem:[#allocation5 + $0xf0] sm:$0xff]
        %v325 = vld [vmem:[#allocation5 + $0xf8] sm:$0xff]
        %v326 = vld [vmem:[#allocation5 + $0x100] sm:$0xff]
        %v327 = vld [vmem:[#allocation5 + $0x108] sm:$0xff]
        %v328 = vld [vmem:[#allocation5 + $0x110] sm:$0xff]
        %v329 = vld [vmem:[#allocation5 + $0x118] sm:$0xff]
        %v330 = vld [vmem:[#allocation5 + $0x120] sm:$0xff]
        %v331 = vld [vmem:[#allocation5 + $0x128] sm:$0xff]
        %v332 = vld [vmem:[#allocation5 + $0x130] sm:$0xff]
        %v333 = vld [vmem:[#allocation5 + $0x138] sm:$0xff]
        %v334 = vld [vmem:[#allocation5 + $0x140] sm:$0xff]
        %v335 = vld [vmem:[#allocation5 + $0x148] sm:$0xff]
        %v336 = vld [vmem:[#allocation5 + $0x150] sm:$0xff]
        %v337 = vld [vmem:[#allocation5 + $0x158] sm:$0xff]
        %v338 = vld [vmem:[#allocation5 + $0x160] sm:$0xff]
        %v339 = vld [vmem:[#allocation5 + $0x168] sm:$0xff]
        %v340 = vld [vmem:[#allocation5 + $0x170] sm:$0xff]
        %v341 = vld [vmem:[#allocation5 + $0x178] sm:$0xff]
        %v342 = vld [vmem:[#allocation5 + $0x180] sm:$0xff]
        %v343 = vld [vmem:[#allocation5 + $0x188] sm:$0xff]
        %v344 = vld [vmem:[#allocation5 + $0x190] sm:$0xff]
        %v345 = vld [vmem:[#allocation5 + $0x198] sm:$0xff]
        %v346 = vld [vmem:[#allocation5 + $0x1a0] sm:$0xff]
        %v347 = vld [vmem:[#allocation5 + $0x1a8] sm:$0xff]
        %v348 = vld [vmem:[#allocation5 + $0x1b0] sm:$0xff]
        %v349 = vld [vmem:[#allocation5 + $0x1b8] sm:$0xff]
        %v350 = vld [vmem:[#allocation5 + $0x1c0] sm:$0xff]
        %v351 = vld [vmem:[#allocation5 + $0x1c8] sm:$0xff]
        %v352 = vld [vmem:[#allocation5 + $0x1d0] sm:$0xff]
        %v353 = vld [vmem:[#allocation5 + $0x1d8] sm:$0xff]
        %v354 = vld [vmem:[#allocation5 + $0x1e0] sm:$0xff]
        %v355 = vld [vmem:[#allocation5 + $0x1e8] sm:$0xff]
        %v356 = vld [vmem:[#allocation5 + $0x1f0] sm:$0xff]
        %v357 = vld [vmem:[#allocation5 + $0x1f8] sm:$0xff]
        %v358 = vld [vmem:[#allocation5 + $0x200] sm:$0xff]
        %v359 = vld [vmem:[#allocation5 + $0x208] sm:$0xff]
        %v360 = vld [vmem:[#allocation5 + $0x210] sm:$0xff]
        %v361 = vld [vmem:[#allocation5 + $0x218] sm:$0xff]
        %v362 = vld [vmem:[#allocation5 + $0x220] sm:$0xff]
        %v363 = vld [vmem:[#allocation5 + $0x228] sm:$0xff]
        %v364 = vld [vmem:[#allocation5 + $0x230] sm:$0xff]
        %v365 = vld [vmem:[#allocation5 + $0x238] sm:$0xff]
        %v366 = vld [vmem:[#allocation5 + $0x240] sm:$0xff]
        %v367 = vld [vmem:[#allocation5 + $0x248] sm:$0xff]
        %v368 = vld [vmem:[#allocation5 + $0x250] sm:$0xff]
        %v369 = vld [vmem:[#allocation5 + $0x258] sm:$0xff]
        %v370 = vld [vmem:[#allocation5 + $0x260] sm:$0xff]
        %v371 = vld [vmem:[#allocation5 + $0x268] sm:$0xff]
        %v372 = vld [vmem:[#allocation5 + $0x270] sm:$0xff]
        %v373 = vld [vmem:[#allocation5 + $0x278] sm:$0xff]
        %v374 = vld [vmem:[#allocation5 + $0x280] sm:$0xff]
        %v375 = vld [vmem:[#allocation5 + $0x288] sm:$0xff]
        %v376 = vld [vmem:[#allocation5 + $0x290] sm:$0xff]
        %v377 = vld [vmem:[#allocation5 + $0x298] sm:$0xff]
        %v378 = vld [vmem:[#allocation5 + $0x2a0] sm:$0xff]
        %v379 = vld [vmem:[#allocation5 + $0x2a8] sm:$0xff]
        %v380 = vld [vmem:[#allocation5 + $0x2b0] sm:$0xff]
        %v381 = vld [vmem:[#allocation5 + $0x2b8] sm:$0xff]
        %v382 = vld [vmem:[#allocation5 + $0x2c0] sm:$0xff]
        %v383 = vld [vmem:[#allocation5 + $0x2c8] sm:$0xff]
        %v384 = vld [vmem:[#allocation5 + $0x2d0] sm:$0xff]
        %v385 = vld [vmem:[#allocation5 + $0x2d8] sm:$0xff]
        %v386 = vld [vmem:[#allocation5 + $0x2e0] sm:$0xff]
        %v387 = vld [vmem:[#allocation5 + $0x2e8] sm:$0xff]
        %v388 = vld [vmem:[#allocation5 + $0x2f0] sm:$0xff]
        %v389 = vld [vmem:[#allocation5 + $0x2f8] sm:$0xff]
        %v390 = vld [vmem:[#allocation5 + $0x300] sm:$0xff]
        %v391 = vld [vmem:[#allocation5 + $0x308] sm:$0xff]
        %v392 = vld [vmem:[#allocation5 + $0x310] sm:$0xff]
        %v393 = vld [vmem:[#allocation5 + $0x318] sm:$0xff]
        %v394 = vld [vmem:[#allocation5 + $0x320] sm:$0xff]
        %v395 = vld [vmem:[#allocation5 + $0x328] sm:$0xff]
        %v396 = vld [vmem:[#allocation5 + $0x330] sm:$0xff]
        %v397 = vld [vmem:[#allocation5 + $0x338] sm:$0xff]
        %v398 = vld [vmem:[#allocation5 + $0x340] sm:$0xff]
        %v399 = vld [vmem:[#allocation5 + $0x348] sm:$0xff]
        %v400 = vld [vmem:[#allocation5 + $0x350] sm:$0xff]
        %v401 = vld [vmem:[#allocation5 + $0x358] sm:$0xff]
        %v402 = vld [vmem:[#allocation5 + $0x360] sm:$0xff]
        %v403 = vld [vmem:[#allocation5 + $0x368] sm:$0xff]
        %v404 = vld [vmem:[#allocation5 + $0x370] sm:$0xff]
        %v405 = vld [vmem:[#allocation5 + $0x378] sm:$0xff]
        %v406 = vld [vmem:[#allocation5 + $0x380] sm:$0xff]
        %v407 = vld [vmem:[#allocation5 + $0x388] sm:$0xff]
        %v408 = vld [vmem:[#allocation5 + $0x390] sm:$0xff]
        %v409 = vld [vmem:[#allocation5 + $0x398] sm:$0xff]
        %v410 = vld [vmem:[#allocation5 + $0x3a0] sm:$0xff]
        %v411 = vld [vmem:[#allocation5 + $0x3a8] sm:$0xff]
        %v412 = vld [vmem:[#allocation5 + $0x3b0] sm:$0xff]
        %v413 = vld [vmem:[#allocation5 + $0x3b8] sm:$0xff]
        %v414 = vld [vmem:[#allocation5 + $0x3c0] sm:$0xff]
        %v415 = vld [vmem:[#allocation5 + $0x3c8] sm:$0xff]
        %v416 = vld [vmem:[#allocation5 + $0x3d0] sm:$0xff]
        %v417 = vld [vmem:[#allocation5 + $0x3d8] sm:$0xff]
        %v418 = vld [vmem:[#allocation5 + $0x3e0] sm:$0xff]
        %v419 = vld [vmem:[#allocation5 + $0x3e8] sm:$0xff]
        %v420 = vld [vmem:[#allocation5 + $0x3f0] sm:$0xff]
        %v421 = vld [vmem:[#allocation5 + $0x3f8] sm:$0xff]
        %v422 = vld [vmem:[#allocation5 + $0x400] sm:$0xff]
        %v423 = vld [vmem:[#allocation5 + $0x408] sm:$0xff]
        %v424 = vld [vmem:[#allocation5 + $0x410] sm:$0xff]
        %v425 = vld [vmem:[#allocation5 + $0x418] sm:$0xff]
        %v426 = vld [vmem:[#allocation5 + $0x420] sm:$0xff]
        %v427 = vld [vmem:[#allocation5 + $0x428] sm:$0xff]
        %v428 = vld [vmem:[#allocation5 + $0x430] sm:$0xff]
        %v429 = vld [vmem:[#allocation5 + $0x438] sm:$0xff]
        %v430 = vld [vmem:[#allocation5 + $0x440] sm:$0xff]
        %v431 = vld [vmem:[#allocation5 + $0x448] sm:$0xff]
        %v432 = vld [vmem:[#allocation5 + $0x450] sm:$0xff]
        %v433 = vld [vmem:[#allocation5 + $0x458] sm:$0xff]
        %v434 = vld [vmem:[#allocation5 + $0x460] sm:$0xff]
        %v435 = vld [vmem:[#allocation5 + $0x468] sm:$0xff]
        %v436 = vld [vmem:[#allocation5 + $0x470] sm:$0xff]
        %v437 = vld [vmem:[#allocation5 + $0x478] sm:$0xff]
        %438 = vmatprep.subr.mxu0 %v340
        %439 = vmatpush1.msra.mxu0 %v339
        %440 = vmatprep.subr.mxu0 %v337
        %441 = vmatpush1.msra.mxu0 %v336
        %442 = vmatprep.subr.mxu0 %v334
        %443 = vmatpush1.msra.mxu0 %v333
        %444 = vmatprep.subr.mxu0 %v331
        %445 = vmatpush1.msra.mxu0 %v330
        %446 = vmatprep.subr.mxu0 %v328
        %447 = vmatpush1.msra.mxu0 %v327
        %448 = vmatprep.subr.mxu0 %v325
        %449 = vmatpush1.msra.mxu0 %v324
        %450 = vmatprep.subr.mxu0 %v322
        %451 = vmatpush1.msra.mxu0 %v321
        %452 = vmatprep.subr.mxu0 %v319
        %453 = vmatpush1.msra.mxu0 %v318
        %454 = vmatprep.subr.mxu0 %v316
        %455 = vmatpush1.msra.mxu0 %v315
        %456 = vmatprep.subr.mxu0 %v313
        %457 = vmatpush1.msra.mxu0 %v312
        %458 = vmatprep.subr.mxu0 %v310
        %459 = vmatpush1.msra.mxu0 %v309
        %460 = vmatprep.subr.mxu0 %v307
        %461 = vmatpush1.msra.mxu0 %v306
        %462 = vmatprep.subr.mxu0 %v304
        %463 = vmatpush1.msra.mxu0 %v303
        %464 = vmatprep.subr.mxu0 %v301
        %465 = vmatpush1.msra.mxu0 %v300
        %466 = vmatprep.subr.mxu0 %v298
        %467 = vmatpush1.msra.mxu0 %v297
        %468 = vmatprep.subr.mxu0 %v295
        %469 = vmatpush1.msra.mxu0 %v294
        %470 = vmatprep.subr.mxu0 %v388
        %471 = vmatpush2.msra.mxu0 %v387
        %472 = vmatprep.subr.mxu0 %v385
        %473 = vmatpush2.msra.mxu0 %v384
        %474 = vmatprep.subr.mxu0 %v382
        %475 = vmatpush2.msra.mxu0 %v381
        %476 = vmatprep.subr.mxu0 %v379
        %477 = vmatpush2.msra.mxu0 %v378
        %478 = vmatprep.subr.mxu0 %v376
        %479 = vmatpush2.msra.mxu0 %v375
        %480 = vmatprep.subr.mxu0 %v373
        %481 = vmatpush2.msra.mxu0 %v372
        %482 = vmatprep.subr.mxu0 %v370
        %483 = vmatpush2.msra.mxu0 %v369
        %484 = vmatprep.subr.mxu0 %v367
        %485 = vmatpush2.msra.mxu0 %v366
        %486 = vmatprep.subr.mxu0 %v364
        %487 = vmatpush2.msra.mxu0 %v363
        %488 = vmatprep.subr.mxu0 %v361
        %489 = vmatpush2.msra.mxu0 %v360
        %490 = vmatprep.subr.mxu0 %v358
        %491 = vmatpush2.msra.mxu0 %v357
        %492 = vmatprep.subr.mxu0 %v355
        %493 = vmatpush2.msra.mxu0 %v354
        %494 = vmatprep.subr.mxu0 %v352
        %495 = vmatpush2.msra.mxu0 %v351
        %496 = vmatprep.subr.mxu0 %v349
        %497 = vmatpush2.msra.mxu0 %v348
        %498 = vmatprep.subr.mxu0 %v346
        %499 = vmatpush2.msra.mxu0 %v345
        %500 = vmatprep.subr.mxu0 %v343
        %501 = vmatpush2.msra.mxu0 %v342
        %502 = vmatprep.mubr.f32.mxu0 %v199
        %503 = vmatmul.mubr.f32.gmra.mxu0 %v198
        %v504 = vpop.f32.mrf.mxu0
        %v505 = vadd.f32 0.0, %v504
        %v506 = vpop.f32.mrf.mxu0
        %v507 = vadd.f32 0.0, %v506
        %508 = vmatprep.mubr.f32.mxu0 %v202
        %509 = vmatmul.mubr.f32.gmra.mxu0 %v201
        %v510 = vpop.f32.mrf.mxu0
        %v511 = vadd.f32 0.0, %v510
        %v512 = vpop.f32.mrf.mxu0
        %v513 = vadd.f32 0.0, %v512
        %514 = vmatprep.mubr.f32.mxu0 %v205
        %515 = vmatmul.mubr.f32.gmra.mxu0 %v204
        %v516 = vpop.f32.mrf.mxu0
        %v517 = vadd.f32 0.0, %v516
        %v518 = vpop.f32.mrf.mxu0
        %v519 = vadd.f32 0.0, %v518
        %520 = vmatprep.mubr.f32.mxu0 %v208
        %521 = vmatmul.mubr.f32.gmra.mxu0 %v207
        %v522 = vpop.f32.mrf.mxu0
        %v523 = vadd.f32 0.0, %v522
        %v524 = vpop.f32.mrf.mxu0
        %v525 = vadd.f32 0.0, %v524
        %526 = vmatprep.mubr.f32.mxu0 %v211
        %527 = vmatmul.mubr.f32.gmra.mxu0 %v210
        %v528 = vpop.f32.mrf.mxu0
        %v529 = vadd.f32 0.0, %v528
        %v530 = vpop.f32.mrf.mxu0
        %v531 = vadd.f32 0.0, %v530
        %532 = vmatprep.mubr.f32.mxu0 %v214
        %533 = vmatmul.mubr.f32.gmra.mxu0 %v213
        %v534 = vpop.f32.mrf.mxu0
        %v535 = vadd.f32 0.0, %v534
        %v536 = vpop.f32.mrf.mxu0
        %v537 = vadd.f32 0.0, %v536
        %538 = vmatprep.mubr.f32.mxu0 %v217
        %539 = vmatmul.mubr.f32.gmra.mxu0 %v216
        %v540 = vpop.f32.mrf.mxu0
        %v541 = vadd.f32 0.0, %v540
        %v542 = vpop.f32.mrf.mxu0
        %v543 = vadd.f32 0.0, %v542
        %544 = vmatprep.mubr.f32.mxu0 %v220
        %545 = vmatmul.mubr.f32.gmra.mxu0 %v219
        %v546 = vpop.f32.mrf.mxu0
        %v547 = vadd.f32 0.0, %v546
        %v548 = vpop.f32.mrf.mxu0
        %v549 = vadd.f32 0.0, %v548
        %550 = vmatprep.mubr.f32.mxu0 %v223
        %551 = vmatmul.mubr.f32.gmra.mxu0 %v222
        %v552 = vpop.f32.mrf.mxu0
        %v553 = vadd.f32 0.0, %v552
        %v554 = vpop.f32.mrf.mxu0
        %v555 = vadd.f32 0.0, %v554
        %556 = vmatprep.mubr.f32.mxu0 %v226
        %557 = vmatmul.mubr.f32.gmra.mxu0 %v225
        %v558 = vpop.f32.mrf.mxu0
        %v559 = vadd.f32 0.0, %v558
        %v560 = vpop.f32.mrf.mxu0
        %v561 = vadd.f32 0.0, %v560
        %562 = vmatprep.mubr.f32.mxu0 %v229
        %563 = vmatmul.mubr.f32.gmra.mxu0 %v228
        %v564 = vpop.f32.mrf.mxu0
        %v565 = vadd.f32 0.0, %v564
        %v566 = vpop.f32.mrf.mxu0
        %v567 = vadd.f32 0.0, %v566
        %568 = vmatprep.mubr.f32.mxu0 %v232
        %569 = vmatmul.mubr.f32.gmra.mxu0 %v231
        %v570 = vpop.f32.mrf.mxu0
        %v571 = vadd.f32 0.0, %v570
        %v572 = vpop.f32.mrf.mxu0
        %v573 = vadd.f32 0.0, %v572
        %574 = vmatprep.mubr.f32.mxu0 %v235
        %575 = vmatmul.mubr.f32.gmra.mxu0 %v234
        %v576 = vpop.f32.mrf.mxu0
        %v577 = vadd.f32 0.0, %v576
        %v578 = vpop.f32.mrf.mxu0
        %v579 = vadd.f32 0.0, %v578
        %580 = vmatprep.mubr.f32.mxu0 %v238
        %581 = vmatmul.mubr.f32.gmra.mxu0 %v237
        %v582 = vpop.f32.mrf.mxu0
        %v583 = vadd.f32 0.0, %v582
        %v584 = vpop.f32.mrf.mxu0
        %v585 = vadd.f32 0.0, %v584
        %586 = vmatprep.mubr.f32.mxu0 %v241
        %587 = vmatmul.mubr.f32.gmra.mxu0 %v240
        %v588 = vpop.f32.mrf.mxu0
        %v589 = vadd.f32 0.0, %v588
        %v590 = vpop.f32.mrf.mxu0
        %v591 = vadd.f32 0.0, %v590
        %592 = vmatprep.mubr.f32.mxu0 %v244
        %593 = vmatmul.mubr.f32.gmra.mxu0 %v243
        %v594 = vpop.f32.mrf.mxu0
        %v595 = vadd.f32 0.0, %v594
        %v596 = vpop.f32.mrf.mxu0
        %v597 = vadd.f32 0.0, %v596
        %598 = vmatprep.mubr.f32.mxu0 %v247
        %599 = vmatmul.mubr.f32.gmra.mxu0 %v246
        %v600 = vpop.f32.mrf.mxu0
        %v601 = vadd.f32 0.0, %v600
        %v602 = vpop.f32.mrf.mxu0
        %v603 = vadd.f32 0.0, %v602
        %604 = vmatprep.mubr.f32.mxu0 %v250
        %605 = vmatmul.mubr.f32.gmra.mxu0 %v249
        %v606 = vpop.f32.mrf.mxu0
        %v607 = vadd.f32 0.0, %v606
        %v608 = vpop.f32.mrf.mxu0
        %v609 = vadd.f32 0.0, %v608
        %610 = vmatprep.mubr.f32.mxu0 %v253
        %611 = vmatmul.mubr.f32.gmra.mxu0 %v252
        %v612 = vpop.f32.mrf.mxu0
        %v613 = vadd.f32 0.0, %v612
        %v614 = vpop.f32.mrf.mxu0
        %v615 = vadd.f32 0.0, %v614
        %616 = vmatprep.mubr.f32.mxu0 %v256
        %617 = vmatmul.mubr.f32.gmra.mxu0 %v255
        %v618 = vpop.f32.mrf.mxu0
        %v619 = vadd.f32 0.0, %v618
        %v620 = vpop.f32.mrf.mxu0
        %v621 = vadd.f32 0.0, %v620
        %622 = vmatprep.mubr.f32.mxu0 %v259
        %623 = vmatmul.mubr.f32.gmra.mxu0 %v258
        %v624 = vpop.f32.mrf.mxu0
        %v625 = vadd.f32 0.0, %v624
        %v626 = vpop.f32.mrf.mxu0
        %v627 = vadd.f32 0.0, %v626
        %628 = vmatprep.mubr.f32.mxu0 %v262
        %629 = vmatmul.mubr.f32.gmra.mxu0 %v261
        %v630 = vpop.f32.mrf.mxu0
        %v631 = vadd.f32 0.0, %v630
        %v632 = vpop.f32.mrf.mxu0
        %v633 = vadd.f32 0.0, %v632
        %634 = vmatprep.mubr.f32.mxu0 %v265
        %635 = vmatmul.mubr.f32.gmra.mxu0 %v264
        %v636 = vpop.f32.mrf.mxu0
        %v637 = vadd.f32 0.0, %v636
        %v638 = vpop.f32.mrf.mxu0
        %v639 = vadd.f32 0.0, %v638
        %640 = vmatprep.mubr.f32.mxu0 %v268
        %641 = vmatmul.mubr.f32.gmra.mxu0 %v267
        %v642 = vpop.f32.mrf.mxu0
        %v643 = vadd.f32 0.0, %v642
        %v644 = vpop.f32.mrf.mxu0
        %v645 = vadd.f32 0.0, %v644
        %646 = vmatprep.mubr.f32.mxu0 %v271
        %647 = vmatmul.mubr.f32.gmra.mxu0 %v270
        %v648 = vpop.f32.mrf.mxu0
        %v649 = vadd.f32 0.0, %v648
        %v650 = vpop.f32.mrf.mxu0
        %v651 = vadd.f32 0.0, %v650
        %652 = vmatprep.mubr.f32.mxu0 %v274
        %653 = vmatmul.mubr.f32.gmra.mxu0 %v273
        %v654 = vpop.f32.mrf.mxu0
        %v655 = vadd.f32 0.0, %v654
        %v656 = vpop.f32.mrf.mxu0
        %v657 = vadd.f32 0.0, %v656
        %658 = vmatprep.mubr.f32.mxu0 %v277
        %659 = vmatmul.mubr.f32.gmra.mxu0 %v276
        %v660 = vpop.f32.mrf.mxu0
        %v661 = vadd.f32 0.0, %v660
        %v662 = vpop.f32.mrf.mxu0
        %v663 = vadd.f32 0.0, %v662
        %664 = vmatprep.mubr.f32.mxu0 %v280
        %665 = vmatmul.mubr.f32.gmra.mxu0 %v279
        %v666 = vpop.f32.mrf.mxu0
        %v667 = vadd.f32 0.0, %v666
        %v668 = vpop.f32.mrf.mxu0
        %v669 = vadd.f32 0.0, %v668
        %670 = vmatprep.mubr.f32.mxu0 %v283
        %671 = vmatmul.mubr.f32.gmra.mxu0 %v282
        %v672 = vpop.f32.mrf.mxu0
        %v673 = vadd.f32 0.0, %v672
        %v674 = vpop.f32.mrf.mxu0
        %v675 = vadd.f32 0.0, %v674
        %676 = vmatprep.mubr.f32.mxu0 %v286
        %677 = vmatmul.mubr.f32.gmra.mxu0 %v285
        %v678 = vpop.f32.mrf.mxu0
        %v679 = vadd.f32 0.0, %v678
        %v680 = vpop.f32.mrf.mxu0
        %v681 = vadd.f32 0.0, %v680
        %682 = vmatprep.mubr.f32.mxu0 %v289
        %683 = vmatmul.mubr.f32.gmra.mxu0 %v288
        %v684 = vpop.f32.mrf.mxu0
        %v685 = vadd.f32 0.0, %v684
        %v686 = vpop.f32.mrf.mxu0
        %v687 = vadd.f32 0.0, %v686
        %688 = vmatprep.mubr.f32.mxu0 %v292
        %689 = vmatmul.mubr.f32.gmra.mxu0 %v291
        %v690 = vpop.f32.mrf.mxu0
        %v691 = vadd.f32 0.0, %v690
        %v692 = vpop.f32.mrf.mxu0
        %v693 = vadd.f32 0.0, %v692
        %694 = vdwg.mxu0
        %695 = vmatprep.subr.mxu0 %v436
        %696 = vmatpush1.msra.mxu0 %v435
        %697 = vmatprep.subr.mxu0 %v433
        %698 = vmatpush1.msra.mxu0 %v432
        %699 = vmatprep.subr.mxu0 %v430
        %700 = vmatpush1.msra.mxu0 %v429
        %701 = vmatprep.subr.mxu0 %v427
        %702 = vmatpush1.msra.mxu0 %v426
        %703 = vmatprep.subr.mxu0 %v424
        %704 = vmatpush1.msra.mxu0 %v423
        %705 = vmatprep.subr.mxu0 %v421
        %706 = vmatpush1.msra.mxu0 %v420
        %707 = vmatprep.subr.mxu0 %v418
        %708 = vmatpush1.msra.mxu0 %v417
        %709 = vmatprep.subr.mxu0 %v415
        %710 = vmatpush1.msra.mxu0 %v414
        %711 = vmatprep.subr.mxu0 %v412
        %712 = vmatpush1.msra.mxu0 %v411
        %713 = vmatprep.subr.mxu0 %v409
        %714 = vmatpush1.msra.mxu0 %v408
        %715 = vmatprep.subr.mxu0 %v406
        %716 = vmatpush1.msra.mxu0 %v405
        %717 = vmatprep.subr.mxu0 %v403
        %718 = vmatpush1.msra.mxu0 %v402
        %719 = vmatprep.subr.mxu0 %v400
        %720 = vmatpush1.msra.mxu0 %v399
        %721 = vmatprep.subr.mxu0 %v397
        %722 = vmatpush1.msra.mxu0 %v396
        %723 = vmatprep.subr.mxu0 %v394
        %724 = vmatpush1.msra.mxu0 %v393
        %725 = vmatprep.subr.mxu0 %v391
        %726 = vmatpush1.msra.mxu0 %v390
        %727 = vmatprep.subr.mxu0 0.0
        %728 = vmatpush2.msra.mxu0 0.0
        %729 = vmatprep.subr.mxu0 0.0
        %730 = vmatpush2.msra.mxu0 0.0
        %731 = vmatprep.subr.mxu0 0.0
        %732 = vmatpush2.msra.mxu0 0.0
        %733 = vmatprep.subr.mxu0 0.0
        %734 = vmatpush2.msra.mxu0 0.0
        %735 = vmatprep.subr.mxu0 0.0
        %736 = vmatpush2.msra.mxu0 0.0
        %737 = vmatprep.subr.mxu0 0.0
        %738 = vmatpush2.msra.mxu0 0.0
        %739 = vmatprep.subr.mxu0 0.0
        %740 = vmatpush2.msra.mxu0 0.0
        %741 = vmatprep.subr.mxu0 0.0
        %742 = vmatpush2.msra.mxu0 0.0
        %743 = vmatprep.subr.mxu0 0.0
        %744 = vmatpush2.msra.mxu0 0.0
        %745 = vmatprep.subr.mxu0 0.0
        %746 = vmatpush2.msra.mxu0 0.0
        %747 = vmatprep.subr.mxu0 0.0
        %748 = vmatpush2.msra.mxu0 0.0
        %749 = vmatprep.subr.mxu0 0.0
        %750 = vmatpush2.msra.mxu0 0.0
        %751 = vmatprep.subr.mxu0 0.0
        %752 = vmatpush2.msra.mxu0 0.0
        %753 = vmatprep.subr.mxu0 0.0
        %754 = vmatpush2.msra.mxu0 0.0
        %755 = vmatprep.subr.mxu0 0.0
        %756 = vmatpush2.msra.mxu0 0.0
        %757 = vmatprep.subr.mxu0 0.0
        %758 = vmatpush2.msra.mxu0 0.0
        %759 = vmatprep.mubr.f32.mxu0 0.0
        %760 = vmatmul.mubr.f32.gmra.mxu0 %v200
        %v761 = vpop.f32.mrf.mxu0
        %v762 = vadd.f32 %v505, %v761
        %v763 = vpop.f32.mrf.mxu0
        %v764 = vadd.f32 %v507, %v763
        %765 = vmatprep.mubr.f32.mxu0 0.0
        %766 = vmatmul.mubr.f32.gmra.mxu0 %v203
        %v767 = vpop.f32.mrf.mxu0
        %v768 = vadd.f32 %v511, %v767
        %v769 = vpop.f32.mrf.mxu0
        %v770 = vadd.f32 %v513, %v769
        %771 = vmatprep.mubr.f32.mxu0 0.0
        %772 = vmatmul.mubr.f32.gmra.mxu0 %v206
        %v773 = vpop.f32.mrf.mxu0
        %v774 = vadd.f32 %v517, %v773
        %v775 = vpop.f32.mrf.mxu0
        %v776 = vadd.f32 %v519, %v775
        %777 = vmatprep.mubr.f32.mxu0 0.0
        %778 = vmatmul.mubr.f32.gmra.mxu0 %v209
        %v779 = vpop.f32.mrf.mxu0
        %v780 = vadd.f32 %v523, %v779
        %v781 = vpop.f32.mrf.mxu0
        %v782 = vadd.f32 %v525, %v781
        %783 = vmatprep.mubr.f32.mxu0 0.0
        %784 = vmatmul.mubr.f32.gmra.mxu0 %v212
        %v785 = vpop.f32.mrf.mxu0
        %v786 = vadd.f32 %v529, %v785
        %v787 = vpop.f32.mrf.mxu0
        %v788 = vadd.f32 %v531, %v787
        %789 = vmatprep.mubr.f32.mxu0 0.0
        %790 = vmatmul.mubr.f32.gmra.mxu0 %v215
        %v791 = vpop.f32.mrf.mxu0
        %v792 = vadd.f32 %v535, %v791
        %v793 = vpop.f32.mrf.mxu0
        %v794 = vadd.f32 %v537, %v793
        %795 = vmatprep.mubr.f32.mxu0 0.0
        %796 = vmatmul.mubr.f32.gmra.mxu0 %v218
        %v797 = vpop.f32.mrf.mxu0
        %v798 = vadd.f32 %v541, %v797
        %v799 = vpop.f32.mrf.mxu0
        %v800 = vadd.f32 %v543, %v799
        %801 = vmatprep.mubr.f32.mxu0 0.0
        %802 = vmatmul.mubr.f32.gmra.mxu0 %v221
        %v803 = vpop.f32.mrf.mxu0
        %v804 = vadd.f32 %v547, %v803
        %v805 = vpop.f32.mrf.mxu0
        %v806 = vadd.f32 %v549, %v805
        %807 = vmatprep.mubr.f32.mxu0 0.0
        %808 = vmatmul.mubr.f32.gmra.mxu0 %v224
        %v809 = vpop.f32.mrf.mxu0
        %v810 = vadd.f32 %v553, %v809
        %v811 = vpop.f32.mrf.mxu0
        %v812 = vadd.f32 %v555, %v811
        %813 = vmatprep.mubr.f32.mxu0 0.0
        %814 = vmatmul.mubr.f32.gmra.mxu0 %v227
        %v815 = vpop.f32.mrf.mxu0
        %v816 = vadd.f32 %v559, %v815
        %v817 = vpop.f32.mrf.mxu0
        %v818 = vadd.f32 %v561, %v817
        %819 = vmatprep.mubr.f32.mxu0 0.0
        %820 = vmatmul.mubr.f32.gmra.mxu0 %v230
        %v821 = vpop.f32.mrf.mxu0
        %v822 = vadd.f32 %v565, %v821
        %v823 = vpop.f32.mrf.mxu0
        %v824 = vadd.f32 %v567, %v823
        %825 = vmatprep.mubr.f32.mxu0 0.0
        %826 = vmatmul.mubr.f32.gmra.mxu0 %v233
        %v827 = vpop.f32.mrf.mxu0
        %v828 = vadd.f32 %v571, %v827
        %v829 = vpop.f32.mrf.mxu0
        %v830 = vadd.f32 %v573, %v829
        %831 = vmatprep.mubr.f32.mxu0 0.0
        %832 = vmatmul.mubr.f32.gmra.mxu0 %v236
        %v833 = vpop.f32.mrf.mxu0
        %v834 = vadd.f32 %v577, %v833
        %v835 = vpop.f32.mrf.mxu0
        %v836 = vadd.f32 %v579, %v835
        %837 = vmatprep.mubr.f32.mxu0 0.0
        %838 = vmatmul.mubr.f32.gmra.mxu0 %v239
        %v839 = vpop.f32.mrf.mxu0
        %v840 = vadd.f32 %v583, %v839
        %v841 = vpop.f32.mrf.mxu0
        %v842 = vadd.f32 %v585, %v841
        %843 = vmatprep.mubr.f32.mxu0 0.0
        %844 = vmatmul.mubr.f32.gmra.mxu0 %v242
        %v845 = vpop.f32.mrf.mxu0
        %v846 = vadd.f32 %v589, %v845
        %v847 = vpop.f32.mrf.mxu0
        %v848 = vadd.f32 %v591, %v847
        %849 = vmatprep.mubr.f32.mxu0 0.0
        %850 = vmatmul.mubr.f32.gmra.mxu0 %v245
        %v851 = vpop.f32.mrf.mxu0
        %v852 = vadd.f32 %v595, %v851
        %v853 = vpop.f32.mrf.mxu0
        %v854 = vadd.f32 %v597, %v853
        %855 = vmatprep.mubr.f32.mxu0 0.0
        %856 = vmatmul.mubr.f32.gmra.mxu0 %v248
        %v857 = vpop.f32.mrf.mxu0
        %v858 = vadd.f32 %v601, %v857
        %v859 = vpop.f32.mrf.mxu0
        %v860 = vadd.f32 %v603, %v859
        %861 = vmatprep.mubr.f32.mxu0 0.0
        %862 = vmatmul.mubr.f32.gmra.mxu0 %v251
        %v863 = vpop.f32.mrf.mxu0
        %v864 = vadd.f32 %v607, %v863
        %v865 = vpop.f32.mrf.mxu0
        %v866 = vadd.f32 %v609, %v865
        %867 = vmatprep.mubr.f32.mxu0 0.0
        %868 = vmatmul.mubr.f32.gmra.mxu0 %v254
        %v869 = vpop.f32.mrf.mxu0
        %v870 = vadd.f32 %v613, %v869
        %v871 = vpop.f32.mrf.mxu0
        %v872 = vadd.f32 %v615, %v871
        %873 = vmatprep.mubr.f32.mxu0 0.0
        %874 = vmatmul.mubr.f32.gmra.mxu0 %v257
        %v875 = vpop.f32.mrf.mxu0
        %v876 = vadd.f32 %v619, %v875
        %v877 = vpop.f32.mrf.mxu0
        %v878 = vadd.f32 %v621, %v877
        %879 = vmatprep.mubr.f32.mxu0 0.0
        %880 = vmatmul.mubr.f32.gmra.mxu0 %v260
        %v881 = vpop.f32.mrf.mxu0
        %v882 = vadd.f32 %v625, %v881
        %v883 = vpop.f32.mrf.mxu0
        %v884 = vadd.f32 %v627, %v883
        %885 = vmatprep.mubr.f32.mxu0 0.0
        %886 = vmatmul.mubr.f32.gmra.mxu0 %v263
        %v887 = vpop.f32.mrf.mxu0
        %v888 = vadd.f32 %v631, %v887
        %v889 = vpop.f32.mrf.mxu0
        %v890 = vadd.f32 %v633, %v889
        %891 = vmatprep.mubr.f32.mxu0 0.0
        %892 = vmatmul.mubr.f32.gmra.mxu0 %v266
        %v893 = vpop.f32.mrf.mxu0
        %v894 = vadd.f32 %v637, %v893
        %v895 = vpop.f32.mrf.mxu0
        %v896 = vadd.f32 %v639, %v895
        %897 = vmatprep.mubr.f32.mxu0 0.0
        %898 = vmatmul.mubr.f32.gmra.mxu0 %v269
        %v899 = vpop.f32.mrf.mxu0
        %v900 = vadd.f32 %v643, %v899
        %v901 = vpop.f32.mrf.mxu0
        %v902 = vadd.f32 %v645, %v901
        %903 = vmatprep.mubr.f32.mxu0 0.0
        %904 = vmatmul.mubr.f32.gmra.mxu0 %v272
        %v905 = vpop.f32.mrf.mxu0
        %v906 = vadd.f32 %v649, %v905
        %v907 = vpop.f32.mrf.mxu0
        %v908 = vadd.f32 %v651, %v907
        %909 = vmatprep.mubr.f32.mxu0 0.0
        %910 = vmatmul.mubr.f32.gmra.mxu0 %v275
        %v911 = vpop.f32.mrf.mxu0
        %v912 = vadd.f32 %v655, %v911
        %v913 = vpop.f32.mrf.mxu0
        %v914 = vadd.f32 %v657, %v913
        %915 = vmatprep.mubr.f32.mxu0 0.0
        %916 = vmatmul.mubr.f32.gmra.mxu0 %v278
        %v917 = vpop.f32.mrf.mxu0
        %v918 = vadd.f32 %v661, %v917
        %v919 = vpop.f32.mrf.mxu0
        %v920 = vadd.f32 %v663, %v919
        %921 = vmatprep.mubr.f32.mxu0 0.0
        %922 = vmatmul.mubr.f32.gmra.mxu0 %v281
        %v923 = vpop.f32.mrf.mxu0
        %v924 = vadd.f32 %v667, %v923
        %v925 = vpop.f32.mrf.mxu0
        %v926 = vadd.f32 %v669, %v925
        %927 = vmatprep.mubr.f32.mxu0 0.0
        %928 = vmatmul.mubr.f32.gmra.mxu0 %v284
        %v929 = vpop.f32.mrf.mxu0
        %v930 = vadd.f32 %v673, %v929
        %v931 = vpop.f32.mrf.mxu0
        %v932 = vadd.f32 %v675, %v931
        %933 = vmatprep.mubr.f32.mxu0 0.0
        %934 = vmatmul.mubr.f32.gmra.mxu0 %v287
        %v935 = vpop.f32.mrf.mxu0
        %v936 = vadd.f32 %v679, %v935
        %v937 = vpop.f32.mrf.mxu0
        %v938 = vadd.f32 %v681, %v937
        %939 = vmatprep.mubr.f32.mxu0 0.0
        %940 = vmatmul.mubr.f32.gmra.mxu0 %v290
        %v941 = vpop.f32.mrf.mxu0
        %v942 = vadd.f32 %v685, %v941
        %v943 = vpop.f32.mrf.mxu0
        %v944 = vadd.f32 %v687, %v943
        %945 = vmatprep.mubr.f32.mxu0 0.0
        %946 = vmatmul.mubr.f32.gmra.mxu0 %v293
        %v947 = vpop.f32.mrf.mxu0
        %v948 = vadd.f32 %v691, %v947
        %v949 = vpop.f32.mrf.mxu0
        %v950 = vadd.f32 %v693, %v949
        %951 = vdwg.mxu0
        %952 = vmatprep.subr.mxu0 0.0
        %953 = vmatpush1.msra.mxu0 %v341
        %954 = vmatprep.subr.mxu0 0.0
        %955 = vmatpush1.msra.mxu0 %v338
        %956 = vmatprep.subr.mxu0 0.0
        %957 = vmatpush1.msra.mxu0 %v335
        %958 = vmatprep.subr.mxu0 0.0
        %959 = vmatpush1.msra.mxu0 %v332
        %960 = vmatprep.subr.mxu0 0.0
        %961 = vmatpush1.msra.mxu0 %v329
        %962 = vmatprep.subr.mxu0 0.0
        %963 = vmatpush1.msra.mxu0 %v326
        %964 = vmatprep.subr.mxu0 0.0
        %965 = vmatpush1.msra.mxu0 %v323
        %966 = vmatprep.subr.mxu0 0.0
        %967 = vmatpush1.msra.mxu0 %v320
        %968 = vmatprep.subr.mxu0 0.0
        %969 = vmatpush1.msra.mxu0 %v317
        %970 = vmatprep.subr.mxu0 0.0
        %971 = vmatpush1.msra.mxu0 %v314
        %972 = vmatprep.subr.mxu0 0.0
        %973 = vmatpush1.msra.mxu0 %v311
        %974 = vmatprep.subr.mxu0 0.0
        %975 = vmatpush1.msra.mxu0 %v308
        %976 = vmatprep.subr.mxu0 0.0
        %977 = vmatpush1.msra.mxu0 %v305
        %978 = vmatprep.subr.mxu0 0.0
        %979 = vmatpush1.msra.mxu0 %v302
        %980 = vmatprep.subr.mxu0 0.0
        %981 = vmatpush1.msra.mxu0 %v299
        %982 = vmatprep.subr.mxu0 0.0
        %983 = vmatpush1.msra.mxu0 %v296
        %984 = vmatprep.subr.mxu0 0.0
        %985 = vmatpush2.msra.mxu0 %v389
        %986 = vmatprep.subr.mxu0 0.0
        %987 = vmatpush2.msra.mxu0 %v386
        %988 = vmatprep.subr.mxu0 0.0
        %989 = vmatpush2.msra.mxu0 %v383
        %990 = vmatprep.subr.mxu0 0.0
        %991 = vmatpush2.msra.mxu0 %v380
        %992 = vmatprep.subr.mxu0 0.0
        %993 = vmatpush2.msra.mxu0 %v377
        %994 = vmatprep.subr.mxu0 0.0
        %995 = vmatpush2.msra.mxu0 %v374
        %996 = vmatprep.subr.mxu0 0.0
        %997 = vmatpush2.msra.mxu0 %v371
        %998 = vmatprep.subr.mxu0 0.0
        %999 = vmatpush2.msra.mxu0 %v368
        %1000 = vmatprep.subr.mxu0 0.0
        %1001 = vmatpush2.msra.mxu0 %v365
        %1002 = vmatprep.subr.mxu0 0.0
        %1003 = vmatpush2.msra.mxu0 %v362
        %1004 = vmatprep.subr.mxu0 0.0
        %1005 = vmatpush2.msra.mxu0 %v359
        %1006 = vmatprep.subr.mxu0 0.0
        %1007 = vmatpush2.msra.mxu0 %v356
        %1008 = vmatprep.subr.mxu0 0.0
        %1009 = vmatpush2.msra.mxu0 %v353
        %1010 = vmatprep.subr.mxu0 0.0
        %1011 = vmatpush2.msra.mxu0 %v350
        %1012 = vmatprep.subr.mxu0 0.0
        %1013 = vmatpush2.msra.mxu0 %v347
        %1014 = vmatprep.subr.mxu0 0.0
        %1015 = vmatpush2.msra.mxu0 %v344
        %1016 = vmatprep.mubr.f32.mxu0 %v199
        %1017 = vmatmul.mubr.f32.gmra.mxu0 %v198
        %v1018 = vpop.f32.mrf.mxu0
        %v1019 = vadd.f32 0.0, %v1018
        %v1020 = vpop.f32.mrf.mxu0
        %1021 = vmatprep.mubr.f32.mxu0 %v202
        %1022 = vmatmul.mubr.f32.gmra.mxu0 %v201
        %v1023 = vpop.f32.mrf.mxu0
        %v1024 = vadd.f32 0.0, %v1023
        %v1025 = vpop.f32.mrf.mxu0
        %1026 = vmatprep.mubr.f32.mxu0 %v205
        %1027 = vmatmul.mubr.f32.gmra.mxu0 %v204
        %v1028 = vpop.f32.mrf.mxu0
        %v1029 = vadd.f32 0.0, %v1028
        %v1030 = vpop.f32.mrf.mxu0
        %1031 = vmatprep.mubr.f32.mxu0 %v208
        %1032 = vmatmul.mubr.f32.gmra.mxu0 %v207
        %v1033 = vpop.f32.mrf.mxu0
        %v1034 = vadd.f32 0.0, %v1033
        %v1035 = vpop.f32.mrf.mxu0
        %1036 = vmatprep.mubr.f32.mxu0 %v211
        %1037 = vmatmul.mubr.f32.gmra.mxu0 %v210
        %v1038 = vpop.f32.mrf.mxu0
        %v1039 = vadd.f32 0.0, %v1038
        %v1040 = vpop.f32.mrf.mxu0
        %1041 = vmatprep.mubr.f32.mxu0 %v214
        %1042 = vmatmul.mubr.f32.gmra.mxu0 %v213
        %v1043 = vpop.f32.mrf.mxu0
        %v1044 = vadd.f32 0.0, %v1043
        %v1045 = vpop.f32.mrf.mxu0
        %1046 = vmatprep.mubr.f32.mxu0 %v217
        %1047 = vmatmul.mubr.f32.gmra.mxu0 %v216
        %v1048 = vpop.f32.mrf.mxu0
        %v1049 = vadd.f32 0.0, %v1048
        %v1050 = vpop.f32.mrf.mxu0
        %1051 = vmatprep.mubr.f32.mxu0 %v220
        %1052 = vmatmul.mubr.f32.gmra.mxu0 %v219
        %v1053 = vpop.f32.mrf.mxu0
        %v1054 = vadd.f32 0.0, %v1053
        %v1055 = vpop.f32.mrf.mxu0
        %1056 = vmatprep.mubr.f32.mxu0 %v223
        %1057 = vmatmul.mubr.f32.gmra.mxu0 %v222
        %v1058 = vpop.f32.mrf.mxu0
        %v1059 = vadd.f32 0.0, %v1058
        %v1060 = vpop.f32.mrf.mxu0
        %1061 = vmatprep.mubr.f32.mxu0 %v226
        %1062 = vmatmul.mubr.f32.gmra.mxu0 %v225
        %v1063 = vpop.f32.mrf.mxu0
        %v1064 = vadd.f32 0.0, %v1063
        %v1065 = vpop.f32.mrf.mxu0
        %1066 = vmatprep.mubr.f32.mxu0 %v229
        %1067 = vmatmul.mubr.f32.gmra.mxu0 %v228
        %v1068 = vpop.f32.mrf.mxu0
        %v1069 = vadd.f32 0.0, %v1068
        %v1070 = vpop.f32.mrf.mxu0
        %1071 = vmatprep.mubr.f32.mxu0 %v232
        %1072 = vmatmul.mubr.f32.gmra.mxu0 %v231
        %v1073 = vpop.f32.mrf.mxu0
        %v1074 = vadd.f32 0.0, %v1073
        %v1075 = vpop.f32.mrf.mxu0
        %1076 = vmatprep.mubr.f32.mxu0 %v235
        %1077 = vmatmul.mubr.f32.gmra.mxu0 %v234
        %v1078 = vpop.f32.mrf.mxu0
        %v1079 = vadd.f32 0.0, %v1078
        %v1080 = vpop.f32.mrf.mxu0
        %1081 = vmatprep.mubr.f32.mxu0 %v238
        %1082 = vmatmul.mubr.f32.gmra.mxu0 %v237
        %v1083 = vpop.f32.mrf.mxu0
        %v1084 = vadd.f32 0.0, %v1083
        %v1085 = vpop.f32.mrf.mxu0
        %1086 = vmatprep.mubr.f32.mxu0 %v241
        %1087 = vmatmul.mubr.f32.gmra.mxu0 %v240
        %v1088 = vpop.f32.mrf.mxu0
        %v1089 = vadd.f32 0.0, %v1088
        %v1090 = vpop.f32.mrf.mxu0
        %1091 = vmatprep.mubr.f32.mxu0 %v244
        %1092 = vmatmul.mubr.f32.gmra.mxu0 %v243
        %v1093 = vpop.f32.mrf.mxu0
        %v1094 = vadd.f32 0.0, %v1093
        %v1095 = vpop.f32.mrf.mxu0
        %1096 = vmatprep.mubr.f32.mxu0 %v247
        %1097 = vmatmul.mubr.f32.gmra.mxu0 %v246
        %v1098 = vpop.f32.mrf.mxu0
        %v1099 = vadd.f32 0.0, %v1098
        %v1100 = vpop.f32.mrf.mxu0
        %1101 = vmatprep.mubr.f32.mxu0 %v250
        %1102 = vmatmul.mubr.f32.gmra.mxu0 %v249
        %v1103 = vpop.f32.mrf.mxu0
        %v1104 = vadd.f32 0.0, %v1103
        %v1105 = vpop.f32.mrf.mxu0
        %1106 = vmatprep.mubr.f32.mxu0 %v253
        %1107 = vmatmul.mubr.f32.gmra.mxu0 %v252
        %v1108 = vpop.f32.mrf.mxu0
        %v1109 = vadd.f32 0.0, %v1108
        %v1110 = vpop.f32.mrf.mxu0
        %1111 = vmatprep.mubr.f32.mxu0 %v256
        %1112 = vmatmul.mubr.f32.gmra.mxu0 %v255
        %v1113 = vpop.f32.mrf.mxu0
        %v1114 = vadd.f32 0.0, %v1113
        %v1115 = vpop.f32.mrf.mxu0
        %1116 = vmatprep.mubr.f32.mxu0 %v259
        %1117 = vmatmul.mubr.f32.gmra.mxu0 %v258
        %v1118 = vpop.f32.mrf.mxu0
        %v1119 = vadd.f32 0.0, %v1118
        %v1120 = vpop.f32.mrf.mxu0
        %1121 = vmatprep.mubr.f32.mxu0 %v262
        %1122 = vmatmul.mubr.f32.gmra.mxu0 %v261
        %v1123 = vpop.f32.mrf.mxu0
        %v1124 = vadd.f32 0.0, %v1123
        %v1125 = vpop.f32.mrf.mxu0
        %1126 = vmatprep.mubr.f32.mxu0 %v265
        %1127 = vmatmul.mubr.f32.gmra.mxu0 %v264
        %v1128 = vpop.f32.mrf.mxu0
        %v1129 = vadd.f32 0.0, %v1128
        %v1130 = vpop.f32.mrf.mxu0
        %1131 = vmatprep.mubr.f32.mxu0 %v268
        %1132 = vmatmul.mubr.f32.gmra.mxu0 %v267
        %v1133 = vpop.f32.mrf.mxu0
        %v1134 = vadd.f32 0.0, %v1133
        %v1135 = vpop.f32.mrf.mxu0
        %1136 = vmatprep.mubr.f32.mxu0 %v271
        %1137 = vmatmul.mubr.f32.gmra.mxu0 %v270
        %v1138 = vpop.f32.mrf.mxu0
        %v1139 = vadd.f32 0.0, %v1138
        %v1140 = vpop.f32.mrf.mxu0
        %1141 = vmatprep.mubr.f32.mxu0 %v274
        %1142 = vmatmul.mubr.f32.gmra.mxu0 %v273
        %v1143 = vpop.f32.mrf.mxu0
        %v1144 = vadd.f32 0.0, %v1143
        %v1145 = vpop.f32.mrf.mxu0
        %1146 = vmatprep.mubr.f32.mxu0 %v277
        %1147 = vmatmul.mubr.f32.gmra.mxu0 %v276
        %v1148 = vpop.f32.mrf.mxu0
        %v1149 = vadd.f32 0.0, %v1148
        %v1150 = vpop.f32.mrf.mxu0
        %1151 = vmatprep.mubr.f32.mxu0 %v280
        %1152 = vmatmul.mubr.f32.gmra.mxu0 %v279
        %v1153 = vpop.f32.mrf.mxu0
        %v1154 = vadd.f32 0.0, %v1153
        %v1155 = vpop.f32.mrf.mxu0
        %1156 = vmatprep.mubr.f32.mxu0 %v283
        %1157 = vmatmul.mubr.f32.gmra.mxu0 %v282
        %v1158 = vpop.f32.mrf.mxu0
        %v1159 = vadd.f32 0.0, %v1158
        %v1160 = vpop.f32.mrf.mxu0
        %1161 = vmatprep.mubr.f32.mxu0 %v286
        %1162 = vmatmul.mubr.f32.gmra.mxu0 %v285
        %v1163 = vpop.f32.mrf.mxu0
        %v1164 = vadd.f32 0.0, %v1163
        %v1165 = vpop.f32.mrf.mxu0
        %1166 = vmatprep.mubr.f32.mxu0 %v289
        %1167 = vmatmul.mubr.f32.gmra.mxu0 %v288
        %v1168 = vpop.f32.mrf.mxu0
        %v1169 = vadd.f32 0.0, %v1168
        %v1170 = vpop.f32.mrf.mxu0
        %1171 = vmatprep.mubr.f32.mxu0 %v292
        %1172 = vmatmul.mubr.f32.gmra.mxu0 %v291
        %v1173 = vpop.f32.mrf.mxu0
        %v1174 = vadd.f32 0.0, %v1173
        %v1175 = vpop.f32.mrf.mxu0
        %1176 = vdwg.mxu0
        %1177 = vmatprep.subr.mxu0 0.0
        %1178 = vmatpush1.msra.mxu0 %v437
        %1179 = vmatprep.subr.mxu0 0.0
        %1180 = vmatpush1.msra.mxu0 %v434
        %1181 = vmatprep.subr.mxu0 0.0
        %1182 = vmatpush1.msra.mxu0 %v431
        %1183 = vmatprep.subr.mxu0 0.0
        %1184 = vmatpush1.msra.mxu0 %v428
        %1185 = vmatprep.subr.mxu0 0.0
        %1186 = vmatpush1.msra.mxu0 %v425
        %1187 = vmatprep.subr.mxu0 0.0
        %1188 = vmatpush1.msra.mxu0 %v422
        %1189 = vmatprep.subr.mxu0 0.0
        %1190 = vmatpush1.msra.mxu0 %v419
        %1191 = vmatprep.subr.mxu0 0.0
        %1192 = vmatpush1.msra.mxu0 %v416
        %1193 = vmatprep.subr.mxu0 0.0
        %1194 = vmatpush1.msra.mxu0 %v413
        %1195 = vmatprep.subr.mxu0 0.0
        %1196 = vmatpush1.msra.mxu0 %v410
        %1197 = vmatprep.subr.mxu0 0.0
        %1198 = vmatpush1.msra.mxu0 %v407
        %1199 = vmatprep.subr.mxu0 0.0
        %1200 = vmatpush1.msra.mxu0 %v404
        %1201 = vmatprep.subr.mxu0 0.0
        %1202 = vmatpush1.msra.mxu0 %v401
        %1203 = vmatprep.subr.mxu0 0.0
        %1204 = vmatpush1.msra.mxu0 %v398
        %1205 = vmatprep.subr.mxu0 0.0
        %1206 = vmatpush1.msra.mxu0 %v395
        %1207 = vmatprep.subr.mxu0 0.0
        %1208 = vmatpush1.msra.mxu0 %v392
        %1209 = vmatprep.subr.mxu0 0.0
        %1210 = vmatpush2.msra.mxu0 0.0
        %1211 = vmatprep.subr.mxu0 0.0
        %1212 = vmatpush2.msra.mxu0 0.0
        %1213 = vmatprep.subr.mxu0 0.0
        %1214 = vmatpush2.msra.mxu0 0.0
        %1215 = vmatprep.subr.mxu0 0.0
        %1216 = vmatpush2.msra.mxu0 0.0
        %1217 = vmatprep.subr.mxu0 0.0
        %1218 = vmatpush2.msra.mxu0 0.0
        %1219 = vmatprep.subr.mxu0 0.0
        %1220 = vmatpush2.msra.mxu0 0.0
        %1221 = vmatprep.subr.mxu0 0.0
        %1222 = vmatpush2.msra.mxu0 0.0
        %1223 = vmatprep.subr.mxu0 0.0
        %1224 = vmatpush2.msra.mxu0 0.0
        %1225 = vmatprep.subr.mxu0 0.0
        %1226 = vmatpush2.msra.mxu0 0.0
        %1227 = vmatprep.subr.mxu0 0.0
        %1228 = vmatpush2.msra.mxu0 0.0
        %1229 = vmatprep.subr.mxu0 0.0
        %1230 = vmatpush2.msra.mxu0 0.0
        %1231 = vmatprep.subr.mxu0 0.0
        %1232 = vmatpush2.msra.mxu0 0.0
        %1233 = vmatprep.subr.mxu0 0.0
        %1234 = vmatpush2.msra.mxu0 0.0
        %1235 = vmatprep.subr.mxu0 0.0
        %1236 = vmatpush2.msra.mxu0 0.0
        %1237 = vmatprep.subr.mxu0 0.0
        %1238 = vmatpush2.msra.mxu0 0.0
        %1239 = vmatprep.subr.mxu0 0.0
        %1240 = vmatpush2.msra.mxu0 0.0
        %1241 = vmatprep.mubr.f32.mxu0 0.0
        %1242 = vmatmul.mubr.f32.gmra.mxu0 %v200
        %v1243 = vpop.f32.mrf.mxu0
        %v1244 = vadd.f32 %v1019, %v1243
        %v1245 = vpop.f32.mrf.mxu0
        %1246 = vmatprep.mubr.f32.mxu0 0.0
        %1247 = vmatmul.mubr.f32.gmra.mxu0 %v203
        %v1248 = vpop.f32.mrf.mxu0
        %v1249 = vadd.f32 %v1024, %v1248
        %v1250 = vpop.f32.mrf.mxu0
        %1251 = vmatprep.mubr.f32.mxu0 0.0
        %1252 = vmatmul.mubr.f32.gmra.mxu0 %v206
        %v1253 = vpop.f32.mrf.mxu0
        %v1254 = vadd.f32 %v1029, %v1253
        %v1255 = vpop.f32.mrf.mxu0
        %1256 = vmatprep.mubr.f32.mxu0 0.0
        %1257 = vmatmul.mubr.f32.gmra.mxu0 %v209
        %v1258 = vpop.f32.mrf.mxu0
        %v1259 = vadd.f32 %v1034, %v1258
        %v1260 = vpop.f32.mrf.mxu0
        %1261 = vmatprep.mubr.f32.mxu0 0.0
        %1262 = vmatmul.mubr.f32.gmra.mxu0 %v212
        %v1263 = vpop.f32.mrf.mxu0
        %v1264 = vadd.f32 %v1039, %v1263
        %v1265 = vpop.f32.mrf.mxu0
        %1266 = vmatprep.mubr.f32.mxu0 0.0
        %1267 = vmatmul.mubr.f32.gmra.mxu0 %v215
        %v1268 = vpop.f32.mrf.mxu0
        %v1269 = vadd.f32 %v1044, %v1268
        %v1270 = vpop.f32.mrf.mxu0
        %1271 = vmatprep.mubr.f32.mxu0 0.0
        %1272 = vmatmul.mubr.f32.gmra.mxu0 %v218
        %v1273 = vpop.f32.mrf.mxu0
        %v1274 = vadd.f32 %v1049, %v1273
        %v1275 = vpop.f32.mrf.mxu0
        %1276 = vmatprep.mubr.f32.mxu0 0.0
        %1277 = vmatmul.mubr.f32.gmra.mxu0 %v221
        %v1278 = vpop.f32.mrf.mxu0
        %v1279 = vadd.f32 %v1054, %v1278
        %v1280 = vpop.f32.mrf.mxu0
        %1281 = vmatprep.mubr.f32.mxu0 0.0
        %1282 = vmatmul.mubr.f32.gmra.mxu0 %v224
        %v1283 = vpop.f32.mrf.mxu0
        %v1284 = vadd.f32 %v1059, %v1283
        %v1285 = vpop.f32.mrf.mxu0
        %1286 = vmatprep.mubr.f32.mxu0 0.0
        %1287 = vmatmul.mubr.f32.gmra.mxu0 %v227
        %v1288 = vpop.f32.mrf.mxu0
        %v1289 = vadd.f32 %v1064, %v1288
        %v1290 = vpop.f32.mrf.mxu0
        %1291 = vmatprep.mubr.f32.mxu0 0.0
        %1292 = vmatmul.mubr.f32.gmra.mxu0 %v230
        %v1293 = vpop.f32.mrf.mxu0
        %v1294 = vadd.f32 %v1069, %v1293
        %v1295 = vpop.f32.mrf.mxu0
        %1296 = vmatprep.mubr.f32.mxu0 0.0
        %1297 = vmatmul.mubr.f32.gmra.mxu0 %v233
        %v1298 = vpop.f32.mrf.mxu0
        %v1299 = vadd.f32 %v1074, %v1298
        %v1300 = vpop.f32.mrf.mxu0
        %1301 = vmatprep.mubr.f32.mxu0 0.0
        %1302 = vmatmul.mubr.f32.gmra.mxu0 %v236
        %v1303 = vpop.f32.mrf.mxu0
        %v1304 = vadd.f32 %v1079, %v1303
        %v1305 = vpop.f32.mrf.mxu0
        %1306 = vmatprep.mubr.f32.mxu0 0.0
        %1307 = vmatmul.mubr.f32.gmra.mxu0 %v239
        %v1308 = vpop.f32.mrf.mxu0
        %v1309 = vadd.f32 %v1084, %v1308
        %v1310 = vpop.f32.mrf.mxu0
        %1311 = vmatprep.mubr.f32.mxu0 0.0
        %1312 = vmatmul.mubr.f32.gmra.mxu0 %v242
        %v1313 = vpop.f32.mrf.mxu0
        %v1314 = vadd.f32 %v1089, %v1313
        %v1315 = vpop.f32.mrf.mxu0
        %1316 = vmatprep.mubr.f32.mxu0 0.0
        %1317 = vmatmul.mubr.f32.gmra.mxu0 %v245
        %v1318 = vpop.f32.mrf.mxu0
        %v1319 = vadd.f32 %v1094, %v1318
        %v1320 = vpop.f32.mrf.mxu0
        %1321 = vmatprep.mubr.f32.mxu0 0.0
        %1322 = vmatmul.mubr.f32.gmra.mxu0 %v248
        %v1323 = vpop.f32.mrf.mxu0
        %v1324 = vadd.f32 %v1099, %v1323
        %v1325 = vpop.f32.mrf.mxu0
        %1326 = vmatprep.mubr.f32.mxu0 0.0
        %1327 = vmatmul.mubr.f32.gmra.mxu0 %v251
        %v1328 = vpop.f32.mrf.mxu0
        %v1329 = vadd.f32 %v1104, %v1328
        %v1330 = vpop.f32.mrf.mxu0
        %1331 = vmatprep.mubr.f32.mxu0 0.0
        %1332 = vmatmul.mubr.f32.gmra.mxu0 %v254
        %v1333 = vpop.f32.mrf.mxu0
        %v1334 = vadd.f32 %v1109, %v1333
        %v1335 = vpop.f32.mrf.mxu0
        %1336 = vmatprep.mubr.f32.mxu0 0.0
        %1337 = vmatmul.mubr.f32.gmra.mxu0 %v257
        %v1338 = vpop.f32.mrf.mxu0
        %v1339 = vadd.f32 %v1114, %v1338
        %v1340 = vpop.f32.mrf.mxu0
        %1341 = vmatprep.mubr.f32.mxu0 0.0
        %1342 = vmatmul.mubr.f32.gmra.mxu0 %v260
        %v1343 = vpop.f32.mrf.mxu0
        %v1344 = vadd.f32 %v1119, %v1343
        %v1345 = vpop.f32.mrf.mxu0
        %1346 = vmatprep.mubr.f32.mxu0 0.0
        %1347 = vmatmul.mubr.f32.gmra.mxu0 %v263
        %v1348 = vpop.f32.mrf.mxu0
        %v1349 = vadd.f32 %v1124, %v1348
        %v1350 = vpop.f32.mrf.mxu0
        %1351 = vmatprep.mubr.f32.mxu0 0.0
        %1352 = vmatmul.mubr.f32.gmra.mxu0 %v266
        %v1353 = vpop.f32.mrf.mxu0
        %v1354 = vadd.f32 %v1129, %v1353
        %v1355 = vpop.f32.mrf.mxu0
        %1356 = vmatprep.mubr.f32.mxu0 0.0
        %1357 = vmatmul.mubr.f32.gmra.mxu0 %v269
        %v1358 = vpop.f32.mrf.mxu0
        %v1359 = vadd.f32 %v1134, %v1358
        %v1360 = vpop.f32.mrf.mxu0
        %1361 = vmatprep.mubr.f32.mxu0 0.0
        %1362 = vmatmul.mubr.f32.gmra.mxu0 %v272
        %v1363 = vpop.f32.mrf.mxu0
        %v1364 = vadd.f32 %v1139, %v1363
        %v1365 = vpop.f32.mrf.mxu0
        %1366 = vmatprep.mubr.f32.mxu0 0.0
        %1367 = vmatmul.mubr.f32.gmra.mxu0 %v275
        %v1368 = vpop.f32.mrf.mxu0
        %v1369 = vadd.f32 %v1144, %v1368
        %v1370 = vpop.f32.mrf.mxu0
        %1371 = vmatprep.mubr.f32.mxu0 0.0
        %1372 = vmatmul.mubr.f32.gmra.mxu0 %v278
        %v1373 = vpop.f32.mrf.mxu0
        %v1374 = vadd.f32 %v1149, %v1373
        %v1375 = vpop.f32.mrf.mxu0
        %1376 = vmatprep.mubr.f32.mxu0 0.0
        %1377 = vmatmul.mubr.f32.gmra.mxu0 %v281
        %v1378 = vpop.f32.mrf.mxu0
        %v1379 = vadd.f32 %v1154, %v1378
        %v1380 = vpop.f32.mrf.mxu0
        %1381 = vmatprep.mubr.f32.mxu0 0.0
        %1382 = vmatmul.mubr.f32.gmra.mxu0 %v284
        %v1383 = vpop.f32.mrf.mxu0
        %v1384 = vadd.f32 %v1159, %v1383
        %v1385 = vpop.f32.mrf.mxu0
        %1386 = vmatprep.mubr.f32.mxu0 0.0
        %1387 = vmatmul.mubr.f32.gmra.mxu0 %v287
        %v1388 = vpop.f32.mrf.mxu0
        %v1389 = vadd.f32 %v1164, %v1388
        %v1390 = vpop.f32.mrf.mxu0
        %1391 = vmatprep.mubr.f32.mxu0 0.0
        %1392 = vmatmul.mubr.f32.gmra.mxu0 %v290
        %v1393 = vpop.f32.mrf.mxu0
        %v1394 = vadd.f32 %v1169, %v1393
        %v1395 = vpop.f32.mrf.mxu0
        %1396 = vmatprep.mubr.f32.mxu0 0.0
        %1397 = vmatmul.mubr.f32.gmra.mxu0 %v293
        %v1398 = vpop.f32.mrf.mxu0
        %v1399 = vadd.f32 %v1174, %v1398
        %v1400 = vpop.f32.mrf.mxu0
        %1401 = vdwg.mxu0
        %1402 = vst [vmem:[%s195] sm:$0xff] %v762
        %1403 = vst [vmem:[%s195 + $0x8] sm:$0xff] %v764
        %1404 = vst [vmem:[%s195 + $0x10] sm:$0xff] %v1244
        %1405 = vst [vmem:[%s195 + $0x18] sm:$0xff] %v768
        %1406 = vst [vmem:[%s195 + $0x20] sm:$0xff] %v770
        %1407 = vst [vmem:[%s195 + $0x28] sm:$0xff] %v1249
        %1408 = vst [vmem:[%s195 + $0x30] sm:$0xff] %v774
        %1409 = vst [vmem:[%s195 + $0x38] sm:$0xff] %v776
        %1410 = vst [vmem:[%s195 + $0x40] sm:$0xff] %v1254
        %1411 = vst [vmem:[%s195 + $0x48] sm:$0xff] %v780
        %1412 = vst [vmem:[%s195 + $0x50] sm:$0xff] %v782
        %1413 = vst [vmem:[%s195 + $0x58] sm:$0xff] %v1259
        %1414 = vst [vmem:[%s195 + $0x60] sm:$0xff] %v786
        %1415 = vst [vmem:[%s195 + $0x68] sm:$0xff] %v788
        %1416 = vst [vmem:[%s195 + $0x70] sm:$0xff] %v1264
        %1417 = vst [vmem:[%s195 + $0x78] sm:$0xff] %v792
        %1418 = vst [vmem:[%s195 + $0x80] sm:$0xff] %v794
        %1419 = vst [vmem:[%s195 + $0x88] sm:$0xff] %v1269
        %1420 = vst [vmem:[%s195 + $0x90] sm:$0xff] %v798
        %1421 = vst [vmem:[%s195 + $0x98] sm:$0xff] %v800
        %1422 = vst [vmem:[%s195 + $0xa0] sm:$0xff] %v1274
        %1423 = vst [vmem:[%s195 + $0xa8] sm:$0xff] %v804
        %1424 = vst [vmem:[%s195 + $0xb0] sm:$0xff] %v806
        %1425 = vst [vmem:[%s195 + $0xb8] sm:$0xff] %v1279
        %1426 = vst [vmem:[%s195 + $0xc0] sm:$0xff] %v810
        %1427 = vst [vmem:[%s195 + $0xc8] sm:$0xff] %v812
        %1428 = vst [vmem:[%s195 + $0xd0] sm:$0xff] %v1284
        %1429 = vst [vmem:[%s195 + $0xd8] sm:$0xff] %v816
        %1430 = vst [vmem:[%s195 + $0xe0] sm:$0xff] %v818
        %1431 = vst [vmem:[%s195 + $0xe8] sm:$0xff] %v1289
        %1432 = vst [vmem:[%s195 + $0xf0] sm:$0xff] %v822
        %1433 = vst [vmem:[%s195 + $0xf8] sm:$0xff] %v824
        %1434 = vst [vmem:[%s195 + $0x100] sm:$0xff] %v1294
        %1435 = vst [vmem:[%s195 + $0x108] sm:$0xff] %v828
        %1436 = vst [vmem:[%s195 + $0x110] sm:$0xff] %v830
        %1437 = vst [vmem:[%s195 + $0x118] sm:$0xff] %v1299
        %1438 = vst [vmem:[%s195 + $0x120] sm:$0xff] %v834
        %1439 = vst [vmem:[%s195 + $0x128] sm:$0xff] %v836
        %1440 = vst [vmem:[%s195 + $0x130] sm:$0xff] %v1304
        %1441 = vst [vmem:[%s195 + $0x138] sm:$0xff] %v840
        %1442 = vst [vmem:[%s195 + $0x140] sm:$0xff] %v842
        %1443 = vst [vmem:[%s195 + $0x148] sm:$0xff] %v1309
        %1444 = vst [vmem:[%s195 + $0x150] sm:$0xff] %v846
        %1445 = vst [vmem:[%s195 + $0x158] sm:$0xff] %v848
        %1446 = vst [vmem:[%s195 + $0x160] sm:$0xff] %v1314
        %1447 = vst [vmem:[%s195 + $0x168] sm:$0xff] %v852
        %1448 = vst [vmem:[%s195 + $0x170] sm:$0xff] %v854
        %1449 = vst [vmem:[%s195 + $0x178] sm:$0xff] %v1319
        %1450 = vst [vmem:[%s195 + $0x180] sm:$0xff] %v858
        %1451 = vst [vmem:[%s195 + $0x188] sm:$0xff] %v860
        %1452 = vst [vmem:[%s195 + $0x190] sm:$0xff] %v1324
        %1453 = vst [vmem:[%s195 + $0x198] sm:$0xff] %v864
        %1454 = vst [vmem:[%s195 + $0x1a0] sm:$0xff] %v866
        %1455 = vst [vmem:[%s195 + $0x1a8] sm:$0xff] %v1329
        %1456 = vst [vmem:[%s195 + $0x1b0] sm:$0xff] %v870
        %1457 = vst [vmem:[%s195 + $0x1b8] sm:$0xff] %v872
        %1458 = vst [vmem:[%s195 + $0x1c0] sm:$0xff] %v1334
        %1459 = vst [vmem:[%s195 + $0x1c8] sm:$0xff] %v876
        %1460 = vst [vmem:[%s195 + $0x1d0] sm:$0xff] %v878
        %1461 = vst [vmem:[%s195 + $0x1d8] sm:$0xff] %v1339
        %1462 = vst [vmem:[%s195 + $0x1e0] sm:$0xff] %v882
        %1463 = vst [vmem:[%s195 + $0x1e8] sm:$0xff] %v884
        %1464 = vst [vmem:[%s195 + $0x1f0] sm:$0xff] %v1344
        %1465 = vst [vmem:[%s195 + $0x1f8] sm:$0xff] %v888
        %1466 = vst [vmem:[%s195 + $0x200] sm:$0xff] %v890
        %1467 = vst [vmem:[%s195 + $0x208] sm:$0xff] %v1349
        %1468 = vst [vmem:[%s195 + $0x210] sm:$0xff] %v894
        %1469 = vst [vmem:[%s195 + $0x218] sm:$0xff] %v896
        %1470 = vst [vmem:[%s195 + $0x220] sm:$0xff] %v1354
        %1471 = vst [vmem:[%s195 + $0x228] sm:$0xff] %v900
        %1472 = vst [vmem:[%s195 + $0x230] sm:$0xff] %v902
        %1473 = vst [vmem:[%s195 + $0x238] sm:$0xff] %v1359
        %1474 = vst [vmem:[%s195 + $0x240] sm:$0xff] %v906
        %1475 = vst [vmem:[%s195 + $0x248] sm:$0xff] %v908
        %1476 = vst [vmem:[%s195 + $0x250] sm:$0xff] %v1364
        %1477 = vst [vmem:[%s195 + $0x258] sm:$0xff] %v912
        %1478 = vst [vmem:[%s195 + $0x260] sm:$0xff] %v914
        %1479 = vst [vmem:[%s195 + $0x268] sm:$0xff] %v1369
        %1480 = vst [vmem:[%s195 + $0x270] sm:$0xff] %v918
        %1481 = vst [vmem:[%s195 + $0x278] sm:$0xff] %v920
        %1482 = vst [vmem:[%s195 + $0x280] sm:$0xff] %v1374
        %1483 = vst [vmem:[%s195 + $0x288] sm:$0xff] %v924
        %1484 = vst [vmem:[%s195 + $0x290] sm:$0xff] %v926
        %1485 = vst [vmem:[%s195 + $0x298] sm:$0xff] %v1379
        %1486 = vst [vmem:[%s195 + $0x2a0] sm:$0xff] %v930
        %1487 = vst [vmem:[%s195 + $0x2a8] sm:$0xff] %v932
        %1488 = vst [vmem:[%s195 + $0x2b0] sm:$0xff] %v1384
        %1489 = vst [vmem:[%s195 + $0x2b8] sm:$0xff] %v936
        %1490 = vst [vmem:[%s195 + $0x2c0] sm:$0xff] %v938
        %1491 = vst [vmem:[%s195 + $0x2c8] sm:$0xff] %v1389
        %1492 = vst [vmem:[%s195 + $0x2d0] sm:$0xff] %v942
        %1493 = vst [vmem:[%s195 + $0x2d8] sm:$0xff] %v944
        %1494 = vst [vmem:[%s195 + $0x2e0] sm:$0xff] %v1394
        %1495 = vst [vmem:[%s195 + $0x2e8] sm:$0xff] %v948
        %1496 = vst [vmem:[%s195 + $0x2f0] sm:$0xff] %v950
        %1497 = vst [vmem:[%s195 + $0x2f8] sm:$0xff] %v1399
        %s1498 = sand.u32 %s91, 1
        %s1499 = scalar_lea.sflag [#allocation4], %s1498
        %s1500 = sand.u32 %s91, 1
        %s1501 = smul.addr %s1500, 768
        %s1502 = scalar_lea.vmem [#allocation7], %s1501
        // Predicated region
        $region37: #{tpu_custom_call.1} parent=27 // pred_check
          %p1503 = pneg %p101
        $region38: #{tpu_custom_call.1} parent=27 // pred_check_branch
          %1505 = sbr.rel (%p1503) target = $region40
        $region39: #{tpu_custom_call.1} parent=27 // pred_region
          %s1506 = smul.u32 32, %s25
          %s1508 = ssub.s32 12288, 12288
          %1509 = vsyncadd %s1499, %s1508
          %s1510 = smul.addr %s1506, 3
          %s1511 = smul.addr %s24, 96
          %s1512 = sadd.s32 %s1510, %s1511
          %s1513 = smul.addr %s1512, 128
          %s1514 = scalar_lea.hbm %s2, %s1513
          %s1515 = sshll.u32 %s1502, 4
          %s1516 = int_to_ptr.vmem [resolvable:$true] %s1515
          %1521 = dma.vmem_to_hbm [thread:$0]  %s1516, 12288, %s1514, %s1499, 384, 384, 24
        $region40: #{tpu_custom_call.1} parent=27 // pred_fallthru
          _
      $region28: #{tpu_custom_call.1} parent=5 // pred_fallthru
        _
      %p1522 = scmp.le.s32.totalorder 2, %s15
      // Predicated region
      $region41: #{tpu_custom_call.1} parent=5 // pred_check
        %p1523 = pneg %p1522
      $region42: #{tpu_custom_call.1} parent=5 // pred_check_branch
        %1525 = sbr.rel (%p1523) target = $region44
      $region43: #{tpu_custom_call.1} parent=5 // pred_region
        %s1526 = ssub.s32 %s15, 2
        // Predicated region
        $region45: #{tpu_custom_call.1} parent=43 // pred_check
          %p1527 = pneg %p107
        $region46: #{tpu_custom_call.1} parent=43 // pred_check_branch
          %1529 = sbr.rel (%p1527) target = $region48
        $region47: #{tpu_custom_call.1} parent=43 // pred_region
          %s1530 = sand.u32 %s92, 1
          %s1531 = scalar_lea.sflag [#allocation4], %s1530
          %s1532 = sand.u32 %s92, 1
          %s1533 = smul.addr %s1532, 768
          %s1534 = scalar_lea.vmem [#allocation7], %s1533
          %1535 = dma.done %s1531, 12288
        $region48: #{tpu_custom_call.1} parent=43 // pred_fallthru
          _
      $region44: #{tpu_custom_call.1} parent=5 // pred_fallthru
        _
    $region6: #{tpu_custom_call.1} parent=1 // loop_footer
      %s19 = sadd.s32 1, %s15
    $region7: #{tpu_custom_call.1} parent=1 // loop_footer_branch
      %14 = sbr.rel target = $region3
    $region8: #{tpu_custom_call.1} parent=1 // loop_exit
      _
    %1536 = vsyncpa [#allocation3], 1
    %s1537 = scalar_lea.sflag [#allocation3], 1
    %1538 = vsyncpa %s1537, 1
    %1539 = vsyncpa [#allocation6], 1
    %1540 = vsyncpa [#allocation4], 1
    %s1541 = scalar_lea.sflag [#allocation4], 1
    %1542 = vsyncpa %s1541, 1

</llo_original>
